<compile_context>
chip_gen: v6e
topology: v6e:2x2x1
jax: 0.10.0
libtpu: 0.0.40
codegen_flags: <defaults>
</compile_context>

<pallas_src>
import jax
import jax.numpy as jnp
from jax.experimental import pallas as pl
from jax.experimental.pallas import tpu as pltpu


def conv_hardsigmoid_kernel(x_ref, w_ref, b_ref, o_ref):
    # x_ref: (16, KH=2, 16, KW*C=128) bf16 — row-strips of the padded NHWC input
    # w_ref: (KH=2, KW*C=128, Cout)    bf16 — resident weight
    # b_ref: (1, Cout) f32             — bias already includes the +3.0
    # o_ref: (256, Cout) f32
    rows = x_ref.shape[0] * x_ref.shape[2]          # 16 * 16 = 256 output positions
    kc = x_ref.shape[3]                             # KW * C = 128
    s0 = x_ref[:, 0, :, :].reshape(rows, kc)        # kh = 0 strip (layout-free reshape)
    s1 = x_ref[:, 1, :, :].reshape(rows, kc)        # kh = 1 strip
    acc = jnp.dot(s0, w_ref[0], preferred_element_type=jnp.float32)
    acc = acc + jnp.dot(s1, w_ref[1], preferred_element_type=jnp.float32)
    acc = acc + b_ref[...]                          # bias (+3.0 folded in)
    o_ref[...] = (jnp.clip(acc, 0.0, 6.0) * (1.0 / 6.0)).astype(o_ref.dtype)


def model_forward(x, weight, bias):
    N, C, H, W = x.shape
    Cout, Cin, KH, KW = weight.shape
    stride, padding = 2, 5
    assert C == Cin and stride == KH == KW
    assert (C, H, W, Cout) == (64, 28, 28, 384)     # design is specialized to the module

    OH = (H + 2 * padding - KH) // stride + 1       # 19
    OW = (W + 2 * padding - KW) // stride + 1       # 19

    # Computed region: oh, ow in [2, 18)  (16 x 16). Rows/cols {0,1,18} are pure
    # zero-padding -> per-channel constant, filled outside the kernel.
    OH_LO, OH_C = 2, 16
    OW_LO, OW_C = 2, 16

    # Minimal zero-pad window needed by the computed region (original coords
    # -1 .. 30 in both spatial dims)  ->  pad (1, 3) on each spatial axis.
    pad_lo = padding - stride * OH_LO                                    # 1
    pad_hi = stride * (OH_LO + OH_C - 1) - padding + (KH - 1) - (H - 1)  # 3
    assert pad_lo == 1 and pad_hi == 3

    # --- glue (one small fused XLA op): NHWC + minimal pad + bf16 cast ------
    x_nhwc = jnp.transpose(x, (0, 2, 3, 1)).astype(jnp.bfloat16)         # (N,28,28,C)
    xp = jnp.pad(x_nhwc, ((0, 0), (pad_lo, pad_hi), (pad_lo, pad_hi), (0, 0)))
    # (N, 2*OH_C, 2*OW_C, C) -> free view (N*OH_C, KH, OW_C, KW*C):
    #   xv[n*16 + r, kh, d, kw*C + c] == xp[n, 2r + kh, 2d + kw, c]
    KC = KW * C                                                          # 128
    xv = xp.reshape(N * OH_C, KH, OW_C, KC)

    # weight (Cout, Cin, KH, KW) -> (KH, KW*Cin, Cout), matching the patch order
    w_r = weight.transpose(2, 3, 1, 0).reshape(KH, KC, Cout).astype(jnp.bfloat16)
    # Fold the +3.0 of hardsigmoid into the bias (kept f32 for accuracy).
    b_r = (bias.astype(jnp.float32) + 3.0).reshape(1, Cout)

    M = N * OH_C * OW_C                  # 512 computed output positions
    tm = OH_C * OW_C                     # 256 rows per grid step (one image)

    out2d = pl.pallas_call(
        conv_hardsigmoid_kernel,
        out_shape=jax.ShapeDtypeStruct((M, Cout), x.dtype),
        grid_spec=pltpu.PrefetchScalarGridSpec(
            num_scalar_prefetch=0,
            grid=(N,),
            in_specs=[
                pl.BlockSpec((OH_C, KH, OW_C, KC), lambda n: (n, 0, 0, 0)),
                pl.BlockSpec((KH, KC, Cout), lambda n: (0, 0, 0)),   # resident weight
                pl.BlockSpec((1, Cout), lambda n: (0, 0)),           # resident bias
            ],
            out_specs=pl.BlockSpec((tm, Cout), lambda n: (n, 0)),
        ),
        compiler_params=pltpu.CompilerParams(
            dimension_semantics=("parallel",)),
    )(xv, w_r, b_r)

    # --- assemble full NCHW output: constant border + computed 16x16 block --
    border = (jnp.clip(bias.astype(jnp.float32) + 3.0, 0.0, 6.0) / 6.0).astype(x.dtype)
    full = jnp.broadcast_to(border[None, :, None, None], (N, Cout, OH, OW))
    interior = out2d.reshape(N, OH_C, OW_C, Cout).transpose(0, 3, 1, 2)
    full = full.at[:, :, OH_LO:OH_LO + OH_C, OW_LO:OW_LO + OW_C].set(interior)
    return full


if __name__ == "__main__":
    key = jax.random.PRNGKey(0)
    k_x, k_w, k_b = jax.random.split(key, 3)

    # Shapes implied by the module: x (2, 64, 28, 28), conv weight (384, 64, 2, 2)
    N, Cin, H, W = 2, 64, 28, 28
    Cout, KH, KW = 384, 2, 2

    x = jax.random.normal(k_x, (N, Cin, H, W), dtype=jnp.float32)

    # Deterministic init mimicking PyTorch Conv2d default (uniform +/- 1/sqrt(fan_in))
    fan_in = Cin * KH * KW
    bound = 1.0 / (fan_in ** 0.5)
    weight = jax.random.uniform(k_w, (Cout, Cin, KH, KW), jnp.float32, -bound, bound)
    bias = jax.random.uniform(k_b, (Cout,), jnp.float32, -bound, bound)

    fwd = jax.jit(model_forward)
    out = fwd(x, weight, bias)
    out = jax.block_until_ready(out)
    assert out.shape == (2, 384, 19, 19), out.shape

    # Cross-check against XLA's f32 conv + hardsigmoid reference.
    # Tolerance relaxed vs. a pure-f32 kernel because the GEMM operands are
    # cast to bf16 (f32 accumulation); hardsigmoid output lies in [0, 1].
    ref_conv = jax.lax.conv_general_dilated(
        x, weight, window_strides=(2, 2), padding=((5, 5), (5, 5)),
        dimension_numbers=("NCHW", "OIHW", "NCHW"))
    ref = jnp.clip(ref_conv + bias[None, :, None, None] + 3.0, 0.0, 6.0) / 6.0
    err = float(jnp.max(jnp.abs(out - ref)))
    assert jnp.allclose(out, ref, atol=2e-2, rtol=0.0), err

    print("KERNEL_OK")
</pallas_src>

<mosaic_0001>
module attributes {stable_mosaic.version = 11 : i64} {
  func.func @conv_hardsigmoid_kernel(%arg0: i32, %arg1: memref<16x2x16x128xbf16, #tpu.memory_space<vmem>>, %arg2: memref<2x128x384xbf16, #tpu.memory_space<vmem>>, %arg3: memref<1x384xf32, #tpu.memory_space<vmem>>, %arg4: memref<256x384xf32, #tpu.memory_space<vmem>>) attributes {dimension_semantics = [#tpu.dimension_semantics<parallel>], iteration_bounds = array<i64: 2>, scalar_prefetch = 0 : i64, scratch_operands = 0 : i64, tpu.core_type = #tpu.core_type<tc>, window_params = [{transform_indices = @transform_0, window_bounds = array<i64: 16, 2, 16, 128>}, {pipeline_mode = #tpu.pipeline_mode<synchronous>, transform_indices = @transform_1, window_bounds = array<i64: 2, 128, 384>}, {pipeline_mode = #tpu.pipeline_mode<synchronous>, transform_indices = @transform_2, window_bounds = array<i64: 1, 384>}, {transform_indices = @transform_3, window_bounds = array<i64: 256, 384>}]} {
    %c0 = arith.constant 0 : index
    %c0_0 = arith.constant 0 : index
    %c0_1 = arith.constant 0 : index
    %c0_2 = arith.constant 0 : index
    %0 = vector.load %arg1[%c0, %c0_0, %c0_1, %c0_2] : memref<16x2x16x128xbf16, #tpu.memory_space<vmem>>, vector<16x1x16x128xbf16>
    %1 = vector.shape_cast %0 : vector<16x1x16x128xbf16> to vector<16x16x128xbf16>
    %2 = vector.shape_cast %1 : vector<16x16x128xbf16> to vector<256x128xbf16>
    %c0_3 = arith.constant 0 : index
    %c1 = arith.constant 1 : index
    %c0_4 = arith.constant 0 : index
    %c0_5 = arith.constant 0 : index
    %3 = vector.load %arg1[%c0_3, %c1, %c0_4, %c0_5] : memref<16x2x16x128xbf16, #tpu.memory_space<vmem>>, vector<16x1x16x128xbf16>
    %4 = vector.shape_cast %3 : vector<16x1x16x128xbf16> to vector<16x16x128xbf16>
    %5 = vector.shape_cast %4 : vector<16x16x128xbf16> to vector<256x128xbf16>
    %c0_6 = arith.constant 0 : index
    %c0_7 = arith.constant 0 : index
    %c0_8 = arith.constant 0 : index
    %6 = vector.load %arg2[%c0_6, %c0_7, %c0_8] : memref<2x128x384xbf16, #tpu.memory_space<vmem>>, vector<1x128x384xbf16>
    %7 = vector.shape_cast %6 : vector<1x128x384xbf16> to vector<128x384xbf16>
    %cst = arith.constant dense<0.000000e+00> : vector<256x384xf32>
    %8 = tpu.matmul %2, %7, %cst {dimension_numbers = #tpu.dot_dimension_numbers<[1], [0], [0], [1], [0, 0, 1, 1], [], []>} : vector<256x128xbf16>, vector<128x384xbf16>, vector<256x384xf32> -> vector<256x384xf32>
    %c1_9 = arith.constant 1 : index
    %c0_10 = arith.constant 0 : index
    %c0_11 = arith.constant 0 : index
    %9 = vector.load %arg2[%c1_9, %c0_10, %c0_11] : memref<2x128x384xbf16, #tpu.memory_space<vmem>>, vector<1x128x384xbf16>
    %10 = vector.shape_cast %9 : vector<1x128x384xbf16> to vector<128x384xbf16>
    %cst_12 = arith.constant dense<0.000000e+00> : vector<256x384xf32>
    %11 = tpu.matmul %5, %10, %cst_12 {dimension_numbers = #tpu.dot_dimension_numbers<[1], [0], [0], [1], [0, 0, 1, 1], [], []>} : vector<256x128xbf16>, vector<128x384xbf16>, vector<256x384xf32> -> vector<256x384xf32>
    %12 = arith.addf %8, %11 : vector<256x384xf32>
    %c0_13 = arith.constant 0 : index
    %c0_14 = arith.constant 0 : index
    %13 = vector.load %arg3[%c0_13, %c0_14] : memref<1x384xf32, #tpu.memory_space<vmem>>, vector<1x384xf32>
    %14 = vector.broadcast %13 : vector<1x384xf32> to vector<256x384xf32>
    %15 = arith.addf %12, %14 : vector<256x384xf32>
    %cst_15 = arith.constant 0.000000e+00 : f32
    %cst_16 = arith.constant 6.000000e+00 : f32
    %16 = vector.broadcast %cst_15 : f32 to vector<256x384xf32>
    %17 = arith.maximumf %16, %15 : vector<256x384xf32>
    %18 = vector.broadcast %cst_16 : f32 to vector<256x384xf32>
    %19 = arith.minimumf %18, %17 : vector<256x384xf32>
    %cst_17 = arith.constant 0.166666672 : f32
    %20 = vector.broadcast %cst_17 : f32 to vector<256x384xf32>
    %21 = arith.mulf %19, %20 : vector<256x384xf32>
    %c0_18 = arith.constant 0 : index
    %c0_19 = arith.constant 0 : index
    %22 = vector.load %arg4[%c0_18, %c0_19] : memref<256x384xf32, #tpu.memory_space<vmem>>, vector<256x384xf32>
    tpu.vector_store %arg4[%c0_18, %c0_19], %21 {strides = array<i32>} : memref<256x384xf32, #tpu.memory_space<vmem>>, vector<256x384xf32>,
    return
  }
  func.func @transform_0(%arg0: i32) -> (i32, i32, i32, i32) {
    %c0_i32 = arith.constant 0 : i32
    %c0_i32_0 = arith.constant 0 : i32
    %c0_i32_1 = arith.constant 0 : i32
    %c0_i32_2 = arith.constant 0 : i32
    return %arg0, %c0_i32, %c0_i32_0, %c0_i32_1 : i32, i32, i32, i32
  }
  func.func @transform_1(%arg0: i32) -> (i32, i32, i32) {
    %c0_i32 = arith.constant 0 : i32
    %c0_i32_0 = arith.constant 0 : i32
    %c0_i32_1 = arith.constant 0 : i32
    %c0_i32_2 = arith.constant 0 : i32
    return %c0_i32, %c0_i32_0, %c0_i32_1 : i32, i32, i32
  }
  func.func @transform_2(%arg0: i32) -> (i32, i32) {
    %c0_i32 = arith.constant 0 : i32
    %c0_i32_0 = arith.constant 0 : i32
    %c0_i32_1 = arith.constant 0 : i32
    return %c0_i32, %c0_i32_0 : i32, i32
  }
  func.func @transform_3(%arg0: i32) -> (i32, i32) {
    %c0_i32 = arith.constant 0 : i32
    %c0_i32_0 = arith.constant 0 : i32
    return %arg0, %c0_i32 : i32, i32
  }
}

</mosaic_0001>

<llo_original>
// kernel: model_forward.1
$region0: #{model_forward.1}
  #allocation0 [shape = 'u32[]', space=smem, size = 0x4, offset = 0x4, fixed_abs, tag = 'smem constant byte address 0x4 - core index']
  #allocation1 [shape = 'u32[144,128]{1,0:T(1,128)}', space=vmem, size = 0x12000, scoped, tag = 'internal scratch']
  %s0 = inlined_call_operand.vmem [shape: bf16[32,2,16,128], index: 0, kind: input, shape index: {}]
  %s1 = inlined_call_operand.vmem [shape: bf16[2,128,384], index: 1, kind: input, shape index: {}]
  %s2 = inlined_call_operand.vmem [shape: f32[1,384], index: 2, kind: input, shape index: {}]
  %s3 = inlined_call_operand.vmem [shape: f32[512,384], index: 3, kind: output, shape index: {}]
  %s4 = sld [smem:[#allocation0]]
  $region45: #{model_forward.1} parent=0
    _
  %s6 = ssub.s32 1, %s4
  %s7 = scalar_select 0, %s6, %s4
  loop: start=0, step=1, limit=4
  $region2: #{model_forward.1} parent=0 // loop_pre_header
    _
  $region3: #{model_forward.1} parent=0 // loop_header
    %s9 = sphi 0, %s13
    %p10 = scmp.ge.s32.totalorder %s9, 4
    %s19 = sphi 0, %s21
    %s22 = sphi 0, %s19
    %s23 = sphi 0, %s22
    %s39 = sphi 0, %s23
    %s43 = sphi 0, %s43
    %s45 = sphi 0, %s43
    %s46 = sphi 0, %s45
    %s60 = sphi 0, %s46
    %s64 = sphi 0, %s64
    %s66 = sphi 0, %s64
    %s67 = sphi 0, %s66
    %s81 = sphi 0, %s67
    %s87 = sphi 0, %s89
    %s90 = sphi 0, %s87
    %s91 = sphi 0, %s90
    %s107 = sphi 0, %s91
  $region4: #{model_forward.1} parent=0 // loop_header_branch
    %12 = sbr.rel (%p10) target = $region8
  $region5: #{model_forward.1} parent=0 // loop_body
    %s14 = ssub.s32 %s9, 1
    %s15 = ssub.s32 %s9, 2
    %s16 = sadd.s32 %s9, 1
    %s17 = ssub.s32 %s9, %s16
    %p18 = scmp.eq.s32.totalorder %s17, 0
    %s20 = sadd.s32 %s19, 1
    %s21 = scalar_select %p18, %s19, %s20
    %p24 = pneg %p18
    %p25 = scmp.eq.s32.totalorder %s9, 1
    %p26 = por %p24, %p25
    %p27 = scmp.ne.s32.totalorder %s19, %s22
    %p28 = scmp.eq.s32.totalorder %s9, 0
    %p29 = por %p27, %p28
    %p30 = scmp.ne.s32.totalorder %s19, %s22
    %p31 = scmp.eq.s32.totalorder %s14, 1
    %p32 = por %p30, %p31
    %p33 = scmp.ne.s32.totalorder %s22, %s23
    %p34 = scmp.eq.s32.totalorder %s14, 0
    %p35 = por %p33, %p34
    %p36 = scmp.ne.s32.totalorder %s22, %s23
    %p37 = scmp.eq.s32.totalorder %s15, 1
    %p38 = por %p36, %p37
    %p40 = scmp.ne.s32.totalorder %s23, %s39
    %p41 = scmp.eq.s32.totalorder %s15, 0
    %p42 = por %p40, %p41
    %s44 = sadd.s32 %s43, 1
    %p47 = scmp.eq.s32.totalorder %s9, 1
    %p48 = scmp.ne.s32.totalorder %s43, %s45
    %p49 = scmp.eq.s32.totalorder %s9, 0
    %p50 = por %p48, %p49
    %p51 = scmp.ne.s32.totalorder %s43, %s45
    %p52 = scmp.eq.s32.totalorder %s14, 1
    %p53 = por %p51, %p52
    %p54 = scmp.ne.s32.totalorder %s45, %s46
    %p55 = scmp.eq.s32.totalorder %s14, 0
    %p56 = por %p54, %p55
    %p57 = scmp.ne.s32.totalorder %s45, %s46
    %p58 = scmp.eq.s32.totalorder %s15, 1
    %p59 = por %p57, %p58
    %p61 = scmp.ne.s32.totalorder %s46, %s60
    %p62 = scmp.eq.s32.totalorder %s15, 0
    %p63 = por %p61, %p62
    %s65 = sadd.s32 %s64, 1
    %p68 = scmp.eq.s32.totalorder %s9, 1
    %p69 = scmp.ne.s32.totalorder %s64, %s66
    %p70 = scmp.eq.s32.totalorder %s9, 0
    %p71 = por %p69, %p70
    %p72 = scmp.ne.s32.totalorder %s64, %s66
    %p73 = scmp.eq.s32.totalorder %s14, 1
    %p74 = por %p72, %p73
    %p75 = scmp.ne.s32.totalorder %s66, %s67
    %p76 = scmp.eq.s32.totalorder %s14, 0
    %p77 = por %p75, %p76
    %p78 = scmp.ne.s32.totalorder %s66, %s67
    %p79 = scmp.eq.s32.totalorder %s15, 1
    %p80 = por %p78, %p79
    %p82 = scmp.ne.s32.totalorder %s67, %s81
    %p83 = scmp.eq.s32.totalorder %s15, 0
    %p84 = por %p82, %p83
    %s85 = ssub.s32 %s9, %s16
    %p86 = scmp.eq.s32.totalorder %s85, 0
    %s88 = sadd.s32 %s87, 1
    %s89 = scalar_select %p86, %s87, %s88
    %p92 = pneg %p86
    %p93 = scmp.eq.s32.totalorder %s9, 1
    %p94 = por %p92, %p93
    %p95 = scmp.ne.s32.totalorder %s87, %s90
    %p96 = scmp.eq.s32.totalorder %s9, 0
    %p97 = por %p95, %p96
    %p98 = scmp.ne.s32.totalorder %s87, %s90
    %p99 = scmp.eq.s32.totalorder %s14, 1
    %p100 = por %p98, %p99
    %p101 = scmp.ne.s32.totalorder %s90, %s91
    %p102 = scmp.eq.s32.totalorder %s14, 0
    %p103 = por %p101, %p102
    %p104 = scmp.ne.s32.totalorder %s90, %s91
    %p105 = scmp.eq.s32.totalorder %s15, 1
    %p106 = por %p104, %p105
    %p108 = scmp.ne.s32.totalorder %s91, %s107
    %p109 = scmp.eq.s32.totalorder %s15, 0
    %p110 = por %p108, %p109
    %p111 = scmp.le.s32.totalorder 1, %s9
    %p112 = scmp.lt.s32.totalorder %s9, 3
    %p113 = pnand %p111, %p112
    %p114 = pneg %p113
    // Predicated region
    $region9: #{model_forward.1} parent=5 // pred_check
      _
    $region10: #{model_forward.1} parent=5 // pred_check_branch
      %116 = sbr.rel (%p113) target = $region12
    $region11: #{model_forward.1} parent=5 // pred_region
      %s117 = ssub.s32 %s9, 1
      // Predicated region
      $region13: #{model_forward.1} parent=11 // pred_check
        %p118 = pneg %p56
      $region14: #{model_forward.1} parent=11 // pred_check_branch
        %120 = sbr.rel (%p118) target = $region16
      $region15: #{model_forward.1} parent=11 // pred_region
        _
      $region16: #{model_forward.1} parent=11 // pred_fallthru
        _
      // Predicated region
      $region17: #{model_forward.1} parent=11 // pred_check
        %p121 = pneg %p77
      $region18: #{model_forward.1} parent=11 // pred_check_branch
        %123 = sbr.rel (%p121) target = $region20
      $region19: #{model_forward.1} parent=11 // pred_region
        _
      $region20: #{model_forward.1} parent=11 // pred_fallthru
        _
    $region12: #{model_forward.1} parent=5 // pred_fallthru
      _
    %p124 = scmp.lt.s32.totalorder %s9, 2
    // Predicated region
    $region21: #{model_forward.1} parent=5 // pred_check
      %p125 = pneg %p124
    $region22: #{model_forward.1} parent=5 // pred_check_branch
      %127 = sbr.rel (%p125) target = $region24
    $region23: #{model_forward.1} parent=5 // pred_region
      // Predicated region
      $region25: #{model_forward.1} parent=23 // pred_check
        %p128 = pneg %p29
      $region26: #{model_forward.1} parent=23 // pred_check_branch
        %130 = sbr.rel (%p128) target = $region28
      $region27: #{model_forward.1} parent=23 // pred_region
        %s131 = smul.u32 16, %s9
        %p132 = scmp.lt.s32.totalorder %s131, 31
        %s133 = scalar_select %p132, %s131, 31
        %s134 = smul.addr %s133, 4
        %s135 = smul.addr %s134, 4
        %s136 = scalar_lea.vmem %s0, %s135
        %s137 = smul.u32 16, %s9
      $region28: #{model_forward.1} parent=23 // pred_fallthru
        _
    $region24: #{model_forward.1} parent=5 // pred_fallthru
      _
    %p138 = scmp.le.s32.totalorder 1, %s9
    %p139 = scmp.lt.s32.totalorder %s9, 3
    %p140 = pnand %p138, %p139
    %p141 = pneg %p140
    // Predicated region
    $region29: #{model_forward.1} parent=5 // pred_check
      _
    $region30: #{model_forward.1} parent=5 // pred_check_branch
      %143 = sbr.rel (%p140) target = $region32
    $region31: #{model_forward.1} parent=5 // pred_region
      %s144 = ssub.s32 %s9, 1
      %s145 = smul.u32 16, %s14
      %p146 = scmp.lt.s32.totalorder %s145, 31
      %s147 = scalar_select %p146, %s145, 31
      %s148 = smul.addr %s147, 4
      %s149 = smul.addr %s148, 4
      %s150 = scalar_lea.vmem %s0, %s149
      %p151 = pneg %p35
      %p152 = pneg %p32
      %p153 = pneg %p56
      %p154 = pneg %p53
      %p155 = pneg %p77
      %p156 = pneg %p74
      %p157 = pneg %p103
      %p158 = pneg %p100
      %s159 = smul.u32 32, %s14
      %p160 = scmp.lt.s32.totalorder %s159, 63
      %s161 = scalar_select %p160, %s159, 63
      %s162 = smul.addr %s161, 3
      %s163 = smul.addr %s162, 8
      %s164 = scalar_lea.vmem %s3, %s163
      %s165 = smul.u32 16, %s14
      %p166 = scmp.lt.s32.totalorder %s165, 31
      %s167 = scalar_select %p166, %s165, 31
      %s168 = smul.addr %s167, 4
      %s169 = smul.addr %s168, 4
      %s170 = scalar_lea.vmem %s0, %s169
      %s171 = smul.u32 16, %s14
      %s172 = smul.u32 32, %s14
      %p173 = scmp.lt.s32.totalorder %s172, 63
      %s174 = scalar_select %p173, %s172, 63
      %s175 = smul.addr %s174, 3
      %s176 = smul.addr %s175, 8
      %s177 = scalar_lea.vmem %s3, %s176
      %s178 = smul.u32 32, %s14
      %v180 = vld [vmem:[%s170] sm:$0xf]
      %v181 = vld [vmem:[%s170 + $0x4] sm:$0xf]
      %v182 = vld [vmem:[%s170 + $0x10] sm:$0xf]
      %v183 = vld [vmem:[%s170 + $0x14] sm:$0xf]
      %v184 = vld [vmem:[%s170 + $0x20] sm:$0xf]
      %v185 = vld [vmem:[%s170 + $0x24] sm:$0xf]
      %v186 = vld [vmem:[%s170 + $0x30] sm:$0xf]
      %v187 = vld [vmem:[%s170 + $0x34] sm:$0xf]
      %v188 = vld [vmem:[%s170 + $0x40] sm:$0xf]
      %v189 = vld [vmem:[%s170 + $0x44] sm:$0xf]
      %v190 = vld [vmem:[%s170 + $0x50] sm:$0xf]
      %v191 = vld [vmem:[%s170 + $0x54] sm:$0xf]
      %v192 = vld [vmem:[%s170 + $0x60] sm:$0xf]
      %v193 = vld [vmem:[%s170 + $0x64] sm:$0xf]
      %v194 = vld [vmem:[%s170 + $0x70] sm:$0xf]
      %v195 = vld [vmem:[%s170 + $0x74] sm:$0xf]
      %v196 = vld [vmem:[%s170 + $0x80] sm:$0xf]
      %v197 = vld [vmem:[%s170 + $0x84] sm:$0xf]
      %v198 = vld [vmem:[%s170 + $0x90] sm:$0xf]
      %v199 = vld [vmem:[%s170 + $0x94] sm:$0xf]
      %v200 = vld [vmem:[%s170 + $0xa0] sm:$0xf]
      %v201 = vld [vmem:[%s170 + $0xa4] sm:$0xf]
      %v202 = vld [vmem:[%s170 + $0xb0] sm:$0xf]
      %v203 = vld [vmem:[%s170 + $0xb4] sm:$0xf]
      %v204 = vld [vmem:[%s170 + $0xc0] sm:$0xf]
      %v205 = vld [vmem:[%s170 + $0xc4] sm:$0xf]
      %v206 = vld [vmem:[%s170 + $0xd0] sm:$0xf]
      %v207 = vld [vmem:[%s170 + $0xd4] sm:$0xf]
      %v208 = vld [vmem:[%s170 + $0xe0] sm:$0xf]
      %v209 = vld [vmem:[%s170 + $0xe4] sm:$0xf]
      %v210 = vld [vmem:[%s170 + $0xf0] sm:$0xf]
      %v211 = vld [vmem:[%s170 + $0xf4] sm:$0xf]
      %s212 = scalar_lea.vmem %s170, 8
      %v213 = vld [vmem:[%s212] sm:$0xf]
      %v214 = vld [vmem:[%s212 + $0x4] sm:$0xf]
      %v215 = vld [vmem:[%s212 + $0x10] sm:$0xf]
      %v216 = vld [vmem:[%s212 + $0x14] sm:$0xf]
      %v217 = vld [vmem:[%s212 + $0x20] sm:$0xf]
      %v218 = vld [vmem:[%s212 + $0x24] sm:$0xf]
      %v219 = vld [vmem:[%s212 + $0x30] sm:$0xf]
      %v220 = vld [vmem:[%s212 + $0x34] sm:$0xf]
      %v221 = vld [vmem:[%s212 + $0x40] sm:$0xf]
      %v222 = vld [vmem:[%s212 + $0x44] sm:$0xf]
      %v223 = vld [vmem:[%s212 + $0x50] sm:$0xf]
      %v224 = vld [vmem:[%s212 + $0x54] sm:$0xf]
      %v225 = vld [vmem:[%s212 + $0x60] sm:$0xf]
      %v226 = vld [vmem:[%s212 + $0x64] sm:$0xf]
      %v227 = vld [vmem:[%s212 + $0x70] sm:$0xf]
      %v228 = vld [vmem:[%s212 + $0x74] sm:$0xf]
      %v229 = vld [vmem:[%s212 + $0x80] sm:$0xf]
      %v230 = vld [vmem:[%s212 + $0x84] sm:$0xf]
      %v231 = vld [vmem:[%s212 + $0x90] sm:$0xf]
      %v232 = vld [vmem:[%s212 + $0x94] sm:$0xf]
      %v233 = vld [vmem:[%s212 + $0xa0] sm:$0xf]
      %v234 = vld [vmem:[%s212 + $0xa4] sm:$0xf]
      %v235 = vld [vmem:[%s212 + $0xb0] sm:$0xf]
      %v236 = vld [vmem:[%s212 + $0xb4] sm:$0xf]
      %v237 = vld [vmem:[%s212 + $0xc0] sm:$0xf]
      %v238 = vld [vmem:[%s212 + $0xc4] sm:$0xf]
      %v239 = vld [vmem:[%s212 + $0xd0] sm:$0xf]
      %v240 = vld [vmem:[%s212 + $0xd4] sm:$0xf]
      %v241 = vld [vmem:[%s212 + $0xe0] sm:$0xf]
      %v242 = vld [vmem:[%s212 + $0xe4] sm:$0xf]
      %v243 = vld [vmem:[%s212 + $0xf0] sm:$0xf]
      %v244 = vld [vmem:[%s212 + $0xf4] sm:$0xf]
      %v245 = vld [vmem:[%s1] sm:$0xff]
      %v246 = vld [vmem:[%s1 + $0x8] sm:$0xf]
      %v247 = vld [vmem:[%s1 + $0xc] sm:$0xff]
      %v248 = vld [vmem:[%s1 + $0x14] sm:$0xf]
      %v249 = vld [vmem:[%s1 + $0x18] sm:$0xff]
      %v250 = vld [vmem:[%s1 + $0x20] sm:$0xf]
      %v251 = vld [vmem:[%s1 + $0x24] sm:$0xff]
      %v252 = vld [vmem:[%s1 + $0x2c] sm:$0xf]
      %v253 = vld [vmem:[%s1 + $0x30] sm:$0xff]
      %v254 = vld [vmem:[%s1 + $0x38] sm:$0xf]
      %v255 = vld [vmem:[%s1 + $0x3c] sm:$0xff]
      %v256 = vld [vmem:[%s1 + $0x44] sm:$0xf]
      %v257 = vld [vmem:[%s1 + $0x48] sm:$0xff]
      %v258 = vld [vmem:[%s1 + $0x50] sm:$0xf]
      %v259 = vld [vmem:[%s1 + $0x54] sm:$0xff]
      %v260 = vld [vmem:[%s1 + $0x5c] sm:$0xf]
      %v261 = vld [vmem:[%s1 + $0x60] sm:$0xff]
      %v262 = vld [vmem:[%s1 + $0x68] sm:$0xf]
      %v263 = vld [vmem:[%s1 + $0x6c] sm:$0xff]
      %v264 = vld [vmem:[%s1 + $0x74] sm:$0xf]
      %v265 = vld [vmem:[%s1 + $0x78] sm:$0xff]
      %v266 = vld [vmem:[%s1 + $0x80] sm:$0xf]
      %v267 = vld [vmem:[%s1 + $0x84] sm:$0xff]
      %v268 = vld [vmem:[%s1 + $0x8c] sm:$0xf]
      %v269 = vld [vmem:[%s1 + $0x90] sm:$0xff]
      %v270 = vld [vmem:[%s1 + $0x98] sm:$0xf]
      %v271 = vld [vmem:[%s1 + $0x9c] sm:$0xff]
      %v272 = vld [vmem:[%s1 + $0xa4] sm:$0xf]
      %v273 = vld [vmem:[%s1 + $0xa8] sm:$0xff]
      %v274 = vld [vmem:[%s1 + $0xb0] sm:$0xf]
      %v275 = vld [vmem:[%s1 + $0xb4] sm:$0xff]
      %v276 = vld [vmem:[%s1 + $0xbc] sm:$0xf]
      %s277 = scalar_lea.vmem %s1, 192
      %v278 = vld [vmem:[%s277] sm:$0xff]
      %v279 = vld [vmem:[%s277 + $0x8] sm:$0xf]
      %v280 = vld [vmem:[%s277 + $0xc] sm:$0xff]
      %v281 = vld [vmem:[%s277 + $0x14] sm:$0xf]
      %v282 = vld [vmem:[%s277 + $0x18] sm:$0xff]
      %v283 = vld [vmem:[%s277 + $0x20] sm:$0xf]
      %v284 = vld [vmem:[%s277 + $0x24] sm:$0xff]
      %v285 = vld [vmem:[%s277 + $0x2c] sm:$0xf]
      %v286 = vld [vmem:[%s277 + $0x30] sm:$0xff]
      %v287 = vld [vmem:[%s277 + $0x38] sm:$0xf]
      %v288 = vld [vmem:[%s277 + $0x3c] sm:$0xff]
      %v289 = vld [vmem:[%s277 + $0x44] sm:$0xf]
      %v290 = vld [vmem:[%s277 + $0x48] sm:$0xff]
      %v291 = vld [vmem:[%s277 + $0x50] sm:$0xf]
      %v292 = vld [vmem:[%s277 + $0x54] sm:$0xff]
      %v293 = vld [vmem:[%s277 + $0x5c] sm:$0xf]
      %v294 = vld [vmem:[%s277 + $0x60] sm:$0xff]
      %v295 = vld [vmem:[%s277 + $0x68] sm:$0xf]
      %v296 = vld [vmem:[%s277 + $0x6c] sm:$0xff]
      %v297 = vld [vmem:[%s277 + $0x74] sm:$0xf]
      %v298 = vld [vmem:[%s277 + $0x78] sm:$0xff]
      %v299 = vld [vmem:[%s277 + $0x80] sm:$0xf]
      %v300 = vld [vmem:[%s277 + $0x84] sm:$0xff]
      %v301 = vld [vmem:[%s277 + $0x8c] sm:$0xf]
      %v302 = vld [vmem:[%s277 + $0x90] sm:$0xff]
      %v303 = vld [vmem:[%s277 + $0x98] sm:$0xf]
      %v304 = vld [vmem:[%s277 + $0x9c] sm:$0xff]
      %v305 = vld [vmem:[%s277 + $0xa4] sm:$0xf]
      %v306 = vld [vmem:[%s277 + $0xa8] sm:$0xff]
      %v307 = vld [vmem:[%s277 + $0xb0] sm:$0xf]
      %v308 = vld [vmem:[%s277 + $0xb4] sm:$0xff]
      %v309 = vld [vmem:[%s277 + $0xbc] sm:$0xf]
      %v342 = vunpack.c.l.b16 %v213
      %v343 = vunpack.c.l.b16 %v214
      %v344 = vunpack.c.l.b16 %v215
      %v345 = vunpack.c.l.b16 %v216
      %v346 = vunpack.c.l.b16 %v217
      %v347 = vunpack.c.l.b16 %v218
      %v348 = vunpack.c.l.b16 %v219
      %v349 = vunpack.c.l.b16 %v220
      %v350 = vunpack.c.l.b16 %v221
      %v351 = vunpack.c.l.b16 %v222
      %v352 = vunpack.c.l.b16 %v223
      %v353 = vunpack.c.l.b16 %v224
      %v354 = vunpack.c.l.b16 %v225
      %v355 = vunpack.c.l.b16 %v226
      %v356 = vunpack.c.l.b16 %v227
      %v357 = vunpack.c.l.b16 %v228
      %v358 = vunpack.c.l.b16 %v229
      %v359 = vunpack.c.l.b16 %v230
      %v360 = vunpack.c.l.b16 %v231
      %v361 = vunpack.c.l.b16 %v232
      %v362 = vunpack.c.l.b16 %v233
      %v363 = vunpack.c.l.b16 %v234
      %v364 = vunpack.c.l.b16 %v235
      %v365 = vunpack.c.l.b16 %v236
      %v366 = vunpack.c.l.b16 %v237
      %v367 = vunpack.c.l.b16 %v238
      %v368 = vunpack.c.l.b16 %v239
      %v369 = vunpack.c.l.b16 %v240
      %v370 = vunpack.c.l.b16 %v241
      %v371 = vunpack.c.l.b16 %v242
      %v372 = vunpack.c.l.b16 %v243
      %v373 = vunpack.c.l.b16 %v244
      %v374 = vpack.c.b16 %v343, %v342
      %v375 = vpack.c.b16 %v345, %v344
      %v376 = vpack.c.b16 %v347, %v346
      %v377 = vpack.c.b16 %v349, %v348
      %v378 = vpack.c.b16 %v351, %v350
      %v379 = vpack.c.b16 %v353, %v352
      %v380 = vpack.c.b16 %v355, %v354
      %v381 = vpack.c.b16 %v357, %v356
      %v382 = vpack.c.b16 %v359, %v358
      %v383 = vpack.c.b16 %v361, %v360
      %v384 = vpack.c.b16 %v363, %v362
      %v385 = vpack.c.b16 %v365, %v364
      %v386 = vpack.c.b16 %v367, %v366
      %v387 = vpack.c.b16 %v369, %v368
      %v388 = vpack.c.b16 %v371, %v370
      %v389 = vpack.c.b16 %v373, %v372
      %v438 = vunpack.c.l.b16 %v278
      %v439 = vunpack.c.h.b16 %v278
      %v440 = vunpack.c.l.b16 %v279
      %v441 = vunpack.c.l.b16 %v280
      %v442 = vunpack.c.h.b16 %v280
      %v443 = vunpack.c.l.b16 %v281
      %v444 = vunpack.c.l.b16 %v282
      %v445 = vunpack.c.h.b16 %v282
      %v446 = vunpack.c.l.b16 %v283
      %v447 = vunpack.c.l.b16 %v284
      %v448 = vunpack.c.h.b16 %v284
      %v449 = vunpack.c.l.b16 %v285
      %v450 = vunpack.c.l.b16 %v286
      %v451 = vunpack.c.h.b16 %v286
      %v452 = vunpack.c.l.b16 %v287
      %v453 = vunpack.c.l.b16 %v288
      %v454 = vunpack.c.h.b16 %v288
      %v455 = vunpack.c.l.b16 %v289
      %v456 = vunpack.c.l.b16 %v290
      %v457 = vunpack.c.h.b16 %v290
      %v458 = vunpack.c.l.b16 %v291
      %v459 = vunpack.c.l.b16 %v292
      %v460 = vunpack.c.h.b16 %v292
      %v461 = vunpack.c.l.b16 %v293
      %v462 = vunpack.c.l.b16 %v294
      %v463 = vunpack.c.h.b16 %v294
      %v464 = vunpack.c.l.b16 %v295
      %v465 = vunpack.c.l.b16 %v296
      %v466 = vunpack.c.h.b16 %v296
      %v467 = vunpack.c.l.b16 %v297
      %v468 = vunpack.c.l.b16 %v298
      %v469 = vunpack.c.h.b16 %v298
      %v470 = vunpack.c.l.b16 %v299
      %v471 = vunpack.c.l.b16 %v300
      %v472 = vunpack.c.h.b16 %v300
      %v473 = vunpack.c.l.b16 %v301
      %v474 = vunpack.c.l.b16 %v302
      %v475 = vunpack.c.h.b16 %v302
      %v476 = vunpack.c.l.b16 %v303
      %v477 = vunpack.c.l.b16 %v304
      %v478 = vunpack.c.h.b16 %v304
      %v479 = vunpack.c.l.b16 %v305
      %v480 = vunpack.c.l.b16 %v306
      %v481 = vunpack.c.h.b16 %v306
      %v482 = vunpack.c.l.b16 %v307
      %v483 = vunpack.c.l.b16 %v308
      %v484 = vunpack.c.h.b16 %v308
      %v485 = vunpack.c.l.b16 %v309
      %v486 = vpack.c.b16 %v441, %v438
      %v487 = vpack.c.b16 %v442, %v439
      %v488 = vpack.c.b16 %v443, %v440
      %v489 = vpack.c.b16 %v447, %v444
      %v490 = vpack.c.b16 %v448, %v445
      %v491 = vpack.c.b16 %v449, %v446
      %v492 = vpack.c.b16 %v453, %v450
      %v493 = vpack.c.b16 %v454, %v451
      %v494 = vpack.c.b16 %v455, %v452
      %v495 = vpack.c.b16 %v459, %v456
      %v496 = vpack.c.b16 %v460, %v457
      %v497 = vpack.c.b16 %v461, %v458
      %v498 = vpack.c.b16 %v465, %v462
      %v499 = vpack.c.b16 %v466, %v463
      %v500 = vpack.c.b16 %v467, %v464
      %v501 = vpack.c.b16 %v471, %v468
      %v502 = vpack.c.b16 %v472, %v469
      %v503 = vpack.c.b16 %v473, %v470
      %v504 = vpack.c.b16 %v477, %v474
      %v505 = vpack.c.b16 %v478, %v475
      %v506 = vpack.c.b16 %v479, %v476
      %v507 = vpack.c.b16 %v483, %v480
      %v508 = vpack.c.b16 %v484, %v481
      %v509 = vpack.c.b16 %v485, %v482
      %534 = vmatprep.subr.bf16.mxu0 %v508
      %535 = vmatpush1.bf16.msra.mxu0 %v507
      %536 = vmatprep.subr.bf16.mxu0 %v505
      %537 = vmatpush1.bf16.msra.mxu0 %v504
      %538 = vmatprep.subr.bf16.mxu0 %v502
      %539 = vmatpush1.bf16.msra.mxu0 %v501
      %540 = vmatprep.subr.bf16.mxu0 %v499
      %541 = vmatpush1.bf16.msra.mxu0 %v498
      %542 = vmatprep.subr.bf16.mxu0 %v496
      %543 = vmatpush1.bf16.msra.mxu0 %v495
      %544 = vmatprep.subr.bf16.mxu0 %v493
      %545 = vmatpush1.bf16.msra.mxu0 %v492
      %546 = vmatprep.subr.bf16.mxu0 %v490
      %547 = vmatpush1.bf16.msra.mxu0 %v489
      %548 = vmatprep.subr.bf16.mxu0 %v487
      %549 = vmatpush1.bf16.msra.mxu0 %v486
      %550 = vmatprep.subr.bf16.mxu0 0
      %551 = vmatpush2.bf16.msra.mxu0 0
      %552 = vmatprep.subr.bf16.mxu0 0
      %553 = vmatpush2.bf16.msra.mxu0 0
      %554 = vmatprep.subr.bf16.mxu0 0
      %555 = vmatpush2.bf16.msra.mxu0 0
      %556 = vmatprep.subr.bf16.mxu0 0
      %557 = vmatpush2.bf16.msra.mxu0 0
      %558 = vmatprep.subr.bf16.mxu0 0
      %559 = vmatpush2.bf16.msra.mxu0 0
      %560 = vmatprep.subr.bf16.mxu0 0
      %561 = vmatpush2.bf16.msra.mxu0 0
      %562 = vmatprep.subr.bf16.mxu0 0
      %563 = vmatpush2.bf16.msra.mxu0 0
      %564 = vmatprep.subr.bf16.mxu0 0
      %565 = vmatpush2.bf16.msra.mxu0 0
      %566 = vmatprep.mubr.bf16.mxu0 0
      %567 = vmatmul.mubr.bf16.gmra.mxu0 %v374
      %v568 = vpop.f32.mrf.mxu0
      %v569 = vadd.f32 0.0, %v568
      %v570 = vpop.f32.mrf.mxu0
      %v571 = vadd.f32 0.0, %v570
      %v572 = vpop.f32.mrf.mxu0
      %v573 = vadd.f32 0.0, %v572
      %v574 = vpop.f32.mrf.mxu0
      %v575 = vadd.f32 0.0, %v574
      %576 = vmatprep.mubr.bf16.mxu0 0
      %577 = vmatmul.mubr.bf16.gmra.mxu0 %v375
      %v578 = vpop.f32.mrf.mxu0
      %v579 = vadd.f32 0.0, %v578
      %v580 = vpop.f32.mrf.mxu0
      %v581 = vadd.f32 0.0, %v580
      %v582 = vpop.f32.mrf.mxu0
      %v583 = vadd.f32 0.0, %v582
      %v584 = vpop.f32.mrf.mxu0
      %v585 = vadd.f32 0.0, %v584
      %586 = vmatprep.mubr.bf16.mxu0 0
      %587 = vmatmul.mubr.bf16.gmra.mxu0 %v376
      %v588 = vpop.f32.mrf.mxu0
      %v589 = vadd.f32 0.0, %v588
      %v590 = vpop.f32.mrf.mxu0
      %v591 = vadd.f32 0.0, %v590
      %v592 = vpop.f32.mrf.mxu0
      %v593 = vadd.f32 0.0, %v592
      %v594 = vpop.f32.mrf.mxu0
      %v595 = vadd.f32 0.0, %v594
      %596 = vmatprep.mubr.bf16.mxu0 0
      %597 = vmatmul.mubr.bf16.gmra.mxu0 %v377
      %v598 = vpop.f32.mrf.mxu0
      %v599 = vadd.f32 0.0, %v598
      %v600 = vpop.f32.mrf.mxu0
      %v601 = vadd.f32 0.0, %v600
      %v602 = vpop.f32.mrf.mxu0
      %v603 = vadd.f32 0.0, %v602
      %v604 = vpop.f32.mrf.mxu0
      %v605 = vadd.f32 0.0, %v604
      %606 = vmatprep.mubr.bf16.mxu0 0
      %607 = vmatmul.mubr.bf16.gmra.mxu0 %v378
      %v608 = vpop.f32.mrf.mxu0
      %v609 = vadd.f32 0.0, %v608
      %v610 = vpop.f32.mrf.mxu0
      %v611 = vadd.f32 0.0, %v610
      %v612 = vpop.f32.mrf.mxu0
      %v613 = vadd.f32 0.0, %v612
      %v614 = vpop.f32.mrf.mxu0
      %v615 = vadd.f32 0.0, %v614
      %616 = vmatprep.mubr.bf16.mxu0 0
      %617 = vmatmul.mubr.bf16.gmra.mxu0 %v379
      %v618 = vpop.f32.mrf.mxu0
      %v619 = vadd.f32 0.0, %v618
      %v620 = vpop.f32.mrf.mxu0
      %v621 = vadd.f32 0.0, %v620
      %v622 = vpop.f32.mrf.mxu0
      %v623 = vadd.f32 0.0, %v622
      %v624 = vpop.f32.mrf.mxu0
      %v625 = vadd.f32 0.0, %v624
      %626 = vmatprep.mubr.bf16.mxu0 0
      %627 = vmatmul.mubr.bf16.gmra.mxu0 %v380
      %v628 = vpop.f32.mrf.mxu0
      %v629 = vadd.f32 0.0, %v628
      %v630 = vpop.f32.mrf.mxu0
      %v631 = vadd.f32 0.0, %v630
      %v632 = vpop.f32.mrf.mxu0
      %v633 = vadd.f32 0.0, %v632
      %v634 = vpop.f32.mrf.mxu0
      %v635 = vadd.f32 0.0, %v634
      %636 = vmatprep.mubr.bf16.mxu0 0
      %637 = vmatmul.mubr.bf16.gmra.mxu0 %v381
      %v638 = vpop.f32.mrf.mxu0
      %v639 = vadd.f32 0.0, %v638
      %v640 = vpop.f32.mrf.mxu0
      %v641 = vadd.f32 0.0, %v640
      %v642 = vpop.f32.mrf.mxu0
      %v643 = vadd.f32 0.0, %v642
      %v644 = vpop.f32.mrf.mxu0
      %v645 = vadd.f32 0.0, %v644
      %646 = vmatprep.mubr.bf16.mxu0 0
      %647 = vmatmul.mubr.bf16.gmra.mxu0 %v382
      %v648 = vpop.f32.mrf.mxu0
      %v649 = vadd.f32 0.0, %v648
      %v650 = vpop.f32.mrf.mxu0
      %v651 = vadd.f32 0.0, %v650
      %v652 = vpop.f32.mrf.mxu0
      %v653 = vadd.f32 0.0, %v652
      %v654 = vpop.f32.mrf.mxu0
      %v655 = vadd.f32 0.0, %v654
      %656 = vmatprep.mubr.bf16.mxu0 0
      %657 = vmatmul.mubr.bf16.gmra.mxu0 %v383
      %v658 = vpop.f32.mrf.mxu0
      %v659 = vadd.f32 0.0, %v658
      %v660 = vpop.f32.mrf.mxu0
      %v661 = vadd.f32 0.0, %v660
      %v662 = vpop.f32.mrf.mxu0
      %v663 = vadd.f32 0.0, %v662
      %v664 = vpop.f32.mrf.mxu0
      %v665 = vadd.f32 0.0, %v664
      %666 = vmatprep.mubr.bf16.mxu0 0
      %667 = vmatmul.mubr.bf16.gmra.mxu0 %v384
      %v668 = vpop.f32.mrf.mxu0
      %v669 = vadd.f32 0.0, %v668
      %v670 = vpop.f32.mrf.mxu0
      %v671 = vadd.f32 0.0, %v670
      %v672 = vpop.f32.mrf.mxu0
      %v673 = vadd.f32 0.0, %v672
      %v674 = vpop.f32.mrf.mxu0
      %v675 = vadd.f32 0.0, %v674
      %676 = vmatprep.mubr.bf16.mxu0 0
      %677 = vmatmul.mubr.bf16.gmra.mxu0 %v385
      %v678 = vpop.f32.mrf.mxu0
      %v679 = vadd.f32 0.0, %v678
      %v680 = vpop.f32.mrf.mxu0
      %v681 = vadd.f32 0.0, %v680
      %v682 = vpop.f32.mrf.mxu0
      %v683 = vadd.f32 0.0, %v682
      %v684 = vpop.f32.mrf.mxu0
      %v685 = vadd.f32 0.0, %v684
      %686 = vmatprep.mubr.bf16.mxu0 0
      %687 = vmatmul.mubr.bf16.gmra.mxu0 %v386
      %v688 = vpop.f32.mrf.mxu0
      %v689 = vadd.f32 0.0, %v688
      %v690 = vpop.f32.mrf.mxu0
      %v691 = vadd.f32 0.0, %v690
      %v692 = vpop.f32.mrf.mxu0
      %v693 = vadd.f32 0.0, %v692
      %v694 = vpop.f32.mrf.mxu0
      %v695 = vadd.f32 0.0, %v694
      %696 = vmatprep.mubr.bf16.mxu0 0
      %697 = vmatmul.mubr.bf16.gmra.mxu0 %v387
      %v698 = vpop.f32.mrf.mxu0
      %v699 = vadd.f32 0.0, %v698
      %v700 = vpop.f32.mrf.mxu0
      %v701 = vadd.f32 0.0, %v700
      %v702 = vpop.f32.mrf.mxu0
      %v703 = vadd.f32 0.0, %v702
      %v704 = vpop.f32.mrf.mxu0
      %v705 = vadd.f32 0.0, %v704
      %706 = vmatprep.mubr.bf16.mxu0 0
      %707 = vmatmul.mubr.bf16.gmra.mxu0 %v388
      %v708 = vpop.f32.mrf.mxu0
      %v709 = vadd.f32 0.0, %v708
      %v710 = vpop.f32.mrf.mxu0
      %v711 = vadd.f32 0.0, %v710
      %v712 = vpop.f32.mrf.mxu0
      %v713 = vadd.f32 0.0, %v712
      %v714 = vpop.f32.mrf.mxu0
      %v715 = vadd.f32 0.0, %v714
      %716 = vmatprep.mubr.bf16.mxu0 0
      %717 = vmatmul.mubr.bf16.gmra.mxu0 %v389
      %v718 = vpop.f32.mrf.mxu0
      %v719 = vadd.f32 0.0, %v718
      %v720 = vpop.f32.mrf.mxu0
      %v721 = vadd.f32 0.0, %v720
      %v722 = vpop.f32.mrf.mxu0
      %v723 = vadd.f32 0.0, %v722
      %v724 = vpop.f32.mrf.mxu0
      %v725 = vadd.f32 0.0, %v724
      %726 = vdwg.mxu0
      %727 = vmatprep.subr.bf16.mxu0 0
      %728 = vmatpush1.bf16.msra.mxu0 %v509
      %729 = vmatprep.subr.bf16.mxu0 0
      %730 = vmatpush1.bf16.msra.mxu0 %v506
      %731 = vmatprep.subr.bf16.mxu0 0
      %732 = vmatpush1.bf16.msra.mxu0 %v503
      %733 = vmatprep.subr.bf16.mxu0 0
      %734 = vmatpush1.bf16.msra.mxu0 %v500
      %735 = vmatprep.subr.bf16.mxu0 0
      %736 = vmatpush1.bf16.msra.mxu0 %v497
      %737 = vmatprep.subr.bf16.mxu0 0
      %738 = vmatpush1.bf16.msra.mxu0 %v494
      %739 = vmatprep.subr.bf16.mxu0 0
      %740 = vmatpush1.bf16.msra.mxu0 %v491
      %741 = vmatprep.subr.bf16.mxu0 0
      %742 = vmatpush1.bf16.msra.mxu0 %v488
      %743 = vmatprep.subr.bf16.mxu0 0
      %744 = vmatpush2.bf16.msra.mxu0 0
      %745 = vmatprep.subr.bf16.mxu0 0
      %746 = vmatpush2.bf16.msra.mxu0 0
      %747 = vmatprep.subr.bf16.mxu0 0
      %748 = vmatpush2.bf16.msra.mxu0 0
      %749 = vmatprep.subr.bf16.mxu0 0
      %750 = vmatpush2.bf16.msra.mxu0 0
      %751 = vmatprep.subr.bf16.mxu0 0
      %752 = vmatpush2.bf16.msra.mxu0 0
      %753 = vmatprep.subr.bf16.mxu0 0
      %754 = vmatpush2.bf16.msra.mxu0 0
      %755 = vmatprep.subr.bf16.mxu0 0
      %756 = vmatpush2.bf16.msra.mxu0 0
      %757 = vmatprep.subr.bf16.mxu0 0
      %758 = vmatpush2.bf16.msra.mxu0 0
      %759 = vmatprep.mubr.bf16.mxu0 0
      %760 = vmatmul.mubr.bf16.gmra.mxu0 %v374
      %v761 = vpop.f32.mrf.mxu0
      %v762 = vadd.f32 0.0, %v761
      %v763 = vpop.f32.mrf.mxu0
      %v764 = vpop.f32.mrf.mxu0
      %v765 = vadd.f32 0.0, %v764
      %v766 = vpop.f32.mrf.mxu0
      %767 = vmatprep.mubr.bf16.mxu0 0
      %768 = vmatmul.mubr.bf16.gmra.mxu0 %v375
      %v769 = vpop.f32.mrf.mxu0
      %v770 = vadd.f32 0.0, %v769
      %v771 = vpop.f32.mrf.mxu0
      %v772 = vpop.f32.mrf.mxu0
      %v773 = vadd.f32 0.0, %v772
      %v774 = vpop.f32.mrf.mxu0
      %775 = vmatprep.mubr.bf16.mxu0 0
      %776 = vmatmul.mubr.bf16.gmra.mxu0 %v376
      %v777 = vpop.f32.mrf.mxu0
      %v778 = vadd.f32 0.0, %v777
      %v779 = vpop.f32.mrf.mxu0
      %v780 = vpop.f32.mrf.mxu0
      %v781 = vadd.f32 0.0, %v780
      %v782 = vpop.f32.mrf.mxu0
      %783 = vmatprep.mubr.bf16.mxu0 0
      %784 = vmatmul.mubr.bf16.gmra.mxu0 %v377
      %v785 = vpop.f32.mrf.mxu0
      %v786 = vadd.f32 0.0, %v785
      %v787 = vpop.f32.mrf.mxu0
      %v788 = vpop.f32.mrf.mxu0
      %v789 = vadd.f32 0.0, %v788
      %v790 = vpop.f32.mrf.mxu0
      %791 = vmatprep.mubr.bf16.mxu0 0
      %792 = vmatmul.mubr.bf16.gmra.mxu0 %v378
      %v793 = vpop.f32.mrf.mxu0
      %v794 = vadd.f32 0.0, %v793
      %v795 = vpop.f32.mrf.mxu0
      %v796 = vpop.f32.mrf.mxu0
      %v797 = vadd.f32 0.0, %v796
      %v798 = vpop.f32.mrf.mxu0
      %799 = vmatprep.mubr.bf16.mxu0 0
      %800 = vmatmul.mubr.bf16.gmra.mxu0 %v379
      %v801 = vpop.f32.mrf.mxu0
      %v802 = vadd.f32 0.0, %v801
      %v803 = vpop.f32.mrf.mxu0
      %v804 = vpop.f32.mrf.mxu0
      %v805 = vadd.f32 0.0, %v804
      %v806 = vpop.f32.mrf.mxu0
      %807 = vmatprep.mubr.bf16.mxu0 0
      %808 = vmatmul.mubr.bf16.gmra.mxu0 %v380
      %v809 = vpop.f32.mrf.mxu0
      %v810 = vadd.f32 0.0, %v809
      %v811 = vpop.f32.mrf.mxu0
      %v812 = vpop.f32.mrf.mxu0
      %v813 = vadd.f32 0.0, %v812
      %v814 = vpop.f32.mrf.mxu0
      %815 = vmatprep.mubr.bf16.mxu0 0
      %816 = vmatmul.mubr.bf16.gmra.mxu0 %v381
      %v817 = vpop.f32.mrf.mxu0
      %v818 = vadd.f32 0.0, %v817
      %v819 = vpop.f32.mrf.mxu0
      %v820 = vpop.f32.mrf.mxu0
      %v821 = vadd.f32 0.0, %v820
      %v822 = vpop.f32.mrf.mxu0
      %823 = vmatprep.mubr.bf16.mxu0 0
      %824 = vmatmul.mubr.bf16.gmra.mxu0 %v382
      %v825 = vpop.f32.mrf.mxu0
      %v826 = vadd.f32 0.0, %v825
      %v827 = vpop.f32.mrf.mxu0
      %v828 = vpop.f32.mrf.mxu0
      %v829 = vadd.f32 0.0, %v828
      %v830 = vpop.f32.mrf.mxu0
      %831 = vmatprep.mubr.bf16.mxu0 0
      %832 = vmatmul.mubr.bf16.gmra.mxu0 %v383
      %v833 = vpop.f32.mrf.mxu0
      %v834 = vadd.f32 0.0, %v833
      %v835 = vpop.f32.mrf.mxu0
      %v836 = vpop.f32.mrf.mxu0
      %v837 = vadd.f32 0.0, %v836
      %v838 = vpop.f32.mrf.mxu0
      %839 = vmatprep.mubr.bf16.mxu0 0
      %840 = vmatmul.mubr.bf16.gmra.mxu0 %v384
      %v841 = vpop.f32.mrf.mxu0
      %v842 = vadd.f32 0.0, %v841
      %v843 = vpop.f32.mrf.mxu0
      %v844 = vpop.f32.mrf.mxu0
      %v845 = vadd.f32 0.0, %v844
      %v846 = vpop.f32.mrf.mxu0
      %847 = vmatprep.mubr.bf16.mxu0 0
      %848 = vmatmul.mubr.bf16.gmra.mxu0 %v385
      %v849 = vpop.f32.mrf.mxu0
      %v850 = vadd.f32 0.0, %v849
      %v851 = vpop.f32.mrf.mxu0
      %v852 = vpop.f32.mrf.mxu0
      %v853 = vadd.f32 0.0, %v852
      %v854 = vpop.f32.mrf.mxu0
      %855 = vmatprep.mubr.bf16.mxu0 0
      %856 = vmatmul.mubr.bf16.gmra.mxu0 %v386
      %v857 = vpop.f32.mrf.mxu0
      %v858 = vadd.f32 0.0, %v857
      %v859 = vpop.f32.mrf.mxu0
      %v860 = vpop.f32.mrf.mxu0
      %v861 = vadd.f32 0.0, %v860
      %v862 = vpop.f32.mrf.mxu0
      %863 = vmatprep.mubr.bf16.mxu0 0
      %864 = vmatmul.mubr.bf16.gmra.mxu0 %v387
      %v865 = vpop.f32.mrf.mxu0
      %v866 = vadd.f32 0.0, %v865
      %v867 = vpop.f32.mrf.mxu0
      %v868 = vpop.f32.mrf.mxu0
      %v869 = vadd.f32 0.0, %v868
      %v870 = vpop.f32.mrf.mxu0
      %871 = vmatprep.mubr.bf16.mxu0 0
      %872 = vmatmul.mubr.bf16.gmra.mxu0 %v388
      %v873 = vpop.f32.mrf.mxu0
      %v874 = vadd.f32 0.0, %v873
      %v875 = vpop.f32.mrf.mxu0
      %v876 = vpop.f32.mrf.mxu0
      %v877 = vadd.f32 0.0, %v876
      %v878 = vpop.f32.mrf.mxu0
      %879 = vmatprep.mubr.bf16.mxu0 0
      %880 = vmatmul.mubr.bf16.gmra.mxu0 %v389
      %v881 = vpop.f32.mrf.mxu0
      %v882 = vadd.f32 0.0, %v881
      %v883 = vpop.f32.mrf.mxu0
      %v884 = vpop.f32.mrf.mxu0
      %v885 = vadd.f32 0.0, %v884
      %v886 = vpop.f32.mrf.mxu0
      %887 = vdwg.mxu0
      %v920 = vunpack.c.l.b16 %v180
      %v921 = vunpack.c.l.b16 %v181
      %v922 = vunpack.c.l.b16 %v182
      %v923 = vunpack.c.l.b16 %v183
      %v924 = vunpack.c.l.b16 %v184
      %v925 = vunpack.c.l.b16 %v185
      %v926 = vunpack.c.l.b16 %v186
      %v927 = vunpack.c.l.b16 %v187
      %v928 = vunpack.c.l.b16 %v188
      %v929 = vunpack.c.l.b16 %v189
      %v930 = vunpack.c.l.b16 %v190
      %v931 = vunpack.c.l.b16 %v191
      %v932 = vunpack.c.l.b16 %v192
      %v933 = vunpack.c.l.b16 %v193
      %v934 = vunpack.c.l.b16 %v194
      %v935 = vunpack.c.l.b16 %v195
      %v936 = vunpack.c.l.b16 %v196
      %v937 = vunpack.c.l.b16 %v197
      %v938 = vunpack.c.l.b16 %v198
      %v939 = vunpack.c.l.b16 %v199
      %v940 = vunpack.c.l.b16 %v200
      %v941 = vunpack.c.l.b16 %v201
      %v942 = vunpack.c.l.b16 %v202
      %v943 = vunpack.c.l.b16 %v203
      %v944 = vunpack.c.l.b16 %v204
      %v945 = vunpack.c.l.b16 %v205
      %v946 = vunpack.c.l.b16 %v206
      %v947 = vunpack.c.l.b16 %v207
      %v948 = vunpack.c.l.b16 %v208
      %v949 = vunpack.c.l.b16 %v209
      %v950 = vunpack.c.l.b16 %v210
      %v951 = vunpack.c.l.b16 %v211
      %v952 = vpack.c.b16 %v921, %v920
      %v953 = vpack.c.b16 %v923, %v922
      %v954 = vpack.c.b16 %v925, %v924
      %v955 = vpack.c.b16 %v927, %v926
      %v956 = vpack.c.b16 %v929, %v928
      %v957 = vpack.c.b16 %v931, %v930
      %v958 = vpack.c.b16 %v933, %v932
      %v959 = vpack.c.b16 %v935, %v934
      %v960 = vpack.c.b16 %v937, %v936
      %v961 = vpack.c.b16 %v939, %v938
      %v962 = vpack.c.b16 %v941, %v940
      %v963 = vpack.c.b16 %v943, %v942
      %v964 = vpack.c.b16 %v945, %v944
      %v965 = vpack.c.b16 %v947, %v946
      %v966 = vpack.c.b16 %v949, %v948
      %v967 = vpack.c.b16 %v951, %v950
      %v1016 = vunpack.c.l.b16 %v245
      %v1017 = vunpack.c.h.b16 %v245
      %v1018 = vunpack.c.l.b16 %v246
      %v1019 = vunpack.c.l.b16 %v247
      %v1020 = vunpack.c.h.b16 %v247
      %v1021 = vunpack.c.l.b16 %v248
      %v1022 = vunpack.c.l.b16 %v249
      %v1023 = vunpack.c.h.b16 %v249
      %v1024 = vunpack.c.l.b16 %v250
      %v1025 = vunpack.c.l.b16 %v251
      %v1026 = vunpack.c.h.b16 %v251
      %v1027 = vunpack.c.l.b16 %v252
      %v1028 = vunpack.c.l.b16 %v253
      %v1029 = vunpack.c.h.b16 %v253
      %v1030 = vunpack.c.l.b16 %v254
      %v1031 = vunpack.c.l.b16 %v255
      %v1032 = vunpack.c.h.b16 %v255
      %v1033 = vunpack.c.l.b16 %v256
      %v1034 = vunpack.c.l.b16 %v257
      %v1035 = vunpack.c.h.b16 %v257
      %v1036 = vunpack.c.l.b16 %v258
      %v1037 = vunpack.c.l.b16 %v259
      %v1038 = vunpack.c.h.b16 %v259
      %v1039 = vunpack.c.l.b16 %v260
      %v1040 = vunpack.c.l.b16 %v261
      %v1041 = vunpack.c.h.b16 %v261
      %v1042 = vunpack.c.l.b16 %v262
      %v1043 = vunpack.c.l.b16 %v263
      %v1044 = vunpack.c.h.b16 %v263
      %v1045 = vunpack.c.l.b16 %v264
      %v1046 = vunpack.c.l.b16 %v265
      %v1047 = vunpack.c.h.b16 %v265
      %v1048 = vunpack.c.l.b16 %v266
      %v1049 = vunpack.c.l.b16 %v267
      %v1050 = vunpack.c.h.b16 %v267
      %v1051 = vunpack.c.l.b16 %v268
      %v1052 = vunpack.c.l.b16 %v269
      %v1053 = vunpack.c.h.b16 %v269
      %v1054 = vunpack.c.l.b16 %v270
      %v1055 = vunpack.c.l.b16 %v271
      %v1056 = vunpack.c.h.b16 %v271
      %v1057 = vunpack.c.l.b16 %v272
      %v1058 = vunpack.c.l.b16 %v273
      %v1059 = vunpack.c.h.b16 %v273
      %v1060 = vunpack.c.l.b16 %v274
      %v1061 = vunpack.c.l.b16 %v275
      %v1062 = vunpack.c.h.b16 %v275
      %v1063 = vunpack.c.l.b16 %v276
      %v1064 = vpack.c.b16 %v1019, %v1016
      %v1065 = vpack.c.b16 %v1020, %v1017
      %v1066 = vpack.c.b16 %v1021, %v1018
      %v1067 = vpack.c.b16 %v1025, %v1022
      %v1068 = vpack.c.b16 %v1026, %v1023
      %v1069 = vpack.c.b16 %v1027, %v1024
      %v1070 = vpack.c.b16 %v1031, %v1028
      %v1071 = vpack.c.b16 %v1032, %v1029
      %v1072 = vpack.c.b16 %v1033, %v1030
      %v1073 = vpack.c.b16 %v1037, %v1034
      %v1074 = vpack.c.b16 %v1038, %v1035
      %v1075 = vpack.c.b16 %v1039, %v1036
      %v1076 = vpack.c.b16 %v1043, %v1040
      %v1077 = vpack.c.b16 %v1044, %v1041
      %v1078 = vpack.c.b16 %v1045, %v1042
      %v1079 = vpack.c.b16 %v1049, %v1046
      %v1080 = vpack.c.b16 %v1050, %v1047
      %v1081 = vpack.c.b16 %v1051, %v1048
      %v1082 = vpack.c.b16 %v1055, %v1052
      %v1083 = vpack.c.b16 %v1056, %v1053
      %v1084 = vpack.c.b16 %v1057, %v1054
      %v1085 = vpack.c.b16 %v1061, %v1058
      %v1086 = vpack.c.b16 %v1062, %v1059
      %v1087 = vpack.c.b16 %v1063, %v1060
      %1112 = vmatprep.subr.bf16.mxu0 %v1086
      %1113 = vmatpush1.bf16.msra.mxu0 %v1085
      %1114 = vmatprep.subr.bf16.mxu0 %v1083
      %1115 = vmatpush1.bf16.msra.mxu0 %v1082
      %1116 = vmatprep.subr.bf16.mxu0 %v1080
      %1117 = vmatpush1.bf16.msra.mxu0 %v1079
      %1118 = vmatprep.subr.bf16.mxu0 %v1077
      %1119 = vmatpush1.bf16.msra.mxu0 %v1076
      %1120 = vmatprep.subr.bf16.mxu0 %v1074
      %1121 = vmatpush1.bf16.msra.mxu0 %v1073
      %1122 = vmatprep.subr.bf16.mxu0 %v1071
      %1123 = vmatpush1.bf16.msra.mxu0 %v1070
      %1124 = vmatprep.subr.bf16.mxu0 %v1068
      %1125 = vmatpush1.bf16.msra.mxu0 %v1067
      %1126 = vmatprep.subr.bf16.mxu0 %v1065
      %1127 = vmatpush1.bf16.msra.mxu0 %v1064
      %1128 = vmatprep.subr.bf16.mxu0 0
      %1129 = vmatpush2.bf16.msra.mxu0 0
      %1130 = vmatprep.subr.bf16.mxu0 0
      %1131 = vmatpush2.bf16.msra.mxu0 0
      %1132 = vmatprep.subr.bf16.mxu0 0
      %1133 = vmatpush2.bf16.msra.mxu0 0
      %1134 = vmatprep.subr.bf16.mxu0 0
      %1135 = vmatpush2.bf16.msra.mxu0 0
      %1136 = vmatprep.subr.bf16.mxu0 0
      %1137 = vmatpush2.bf16.msra.mxu0 0
      %1138 = vmatprep.subr.bf16.mxu0 0
      %1139 = vmatpush2.bf16.msra.mxu0 0
      %1140 = vmatprep.subr.bf16.mxu0 0
      %1141 = vmatpush2.bf16.msra.mxu0 0
      %1142 = vmatprep.subr.bf16.mxu0 0
      %1143 = vmatpush2.bf16.msra.mxu0 0
      %1144 = vmatprep.mubr.bf16.mxu0 0
      %1145 = vmatmul.mubr.bf16.gmra.mxu0 %v952
      %v1146 = vpop.f32.mrf.mxu0
      %v1147 = vadd.f32 %v569, %v1146
      %v1148 = vpop.f32.mrf.mxu0
      %v1149 = vadd.f32 %v571, %v1148
      %v1150 = vpop.f32.mrf.mxu0
      %v1151 = vadd.f32 %v573, %v1150
      %v1152 = vpop.f32.mrf.mxu0
      %v1153 = vadd.f32 %v575, %v1152
      %1154 = vmatprep.mubr.bf16.mxu0 0
      %1155 = vmatmul.mubr.bf16.gmra.mxu0 %v953
      %v1156 = vpop.f32.mrf.mxu0
      %v1157 = vadd.f32 %v579, %v1156
      %v1158 = vpop.f32.mrf.mxu0
      %v1159 = vadd.f32 %v581, %v1158
      %v1160 = vpop.f32.mrf.mxu0
      %v1161 = vadd.f32 %v583, %v1160
      %v1162 = vpop.f32.mrf.mxu0
      %v1163 = vadd.f32 %v585, %v1162
      %1164 = vmatprep.mubr.bf16.mxu0 0
      %1165 = vmatmul.mubr.bf16.gmra.mxu0 %v954
      %v1166 = vpop.f32.mrf.mxu0
      %v1167 = vadd.f32 %v589, %v1166
      %v1168 = vpop.f32.mrf.mxu0
      %v1169 = vadd.f32 %v591, %v1168
      %v1170 = vpop.f32.mrf.mxu0
      %v1171 = vadd.f32 %v593, %v1170
      %v1172 = vpop.f32.mrf.mxu0
      %v1173 = vadd.f32 %v595, %v1172
      %1174 = vmatprep.mubr.bf16.mxu0 0
      %1175 = vmatmul.mubr.bf16.gmra.mxu0 %v955
      %v1176 = vpop.f32.mrf.mxu0
      %v1177 = vadd.f32 %v599, %v1176
      %v1178 = vpop.f32.mrf.mxu0
      %v1179 = vadd.f32 %v601, %v1178
      %v1180 = vpop.f32.mrf.mxu0
      %v1181 = vadd.f32 %v603, %v1180
      %v1182 = vpop.f32.mrf.mxu0
      %v1183 = vadd.f32 %v605, %v1182
      %1184 = vmatprep.mubr.bf16.mxu0 0
      %1185 = vmatmul.mubr.bf16.gmra.mxu0 %v956
      %v1186 = vpop.f32.mrf.mxu0
      %v1187 = vadd.f32 %v609, %v1186
      %v1188 = vpop.f32.mrf.mxu0
      %v1189 = vadd.f32 %v611, %v1188
      %v1190 = vpop.f32.mrf.mxu0
      %v1191 = vadd.f32 %v613, %v1190
      %v1192 = vpop.f32.mrf.mxu0
      %v1193 = vadd.f32 %v615, %v1192
      %1194 = vmatprep.mubr.bf16.mxu0 0
      %1195 = vmatmul.mubr.bf16.gmra.mxu0 %v957
      %v1196 = vpop.f32.mrf.mxu0
      %v1197 = vadd.f32 %v619, %v1196
      %v1198 = vpop.f32.mrf.mxu0
      %v1199 = vadd.f32 %v621, %v1198
      %v1200 = vpop.f32.mrf.mxu0
      %v1201 = vadd.f32 %v623, %v1200
      %v1202 = vpop.f32.mrf.mxu0
      %v1203 = vadd.f32 %v625, %v1202
      %1204 = vmatprep.mubr.bf16.mxu0 0
      %1205 = vmatmul.mubr.bf16.gmra.mxu0 %v958
      %v1206 = vpop.f32.mrf.mxu0
      %v1207 = vadd.f32 %v629, %v1206
      %v1208 = vpop.f32.mrf.mxu0
      %v1209 = vadd.f32 %v631, %v1208
      %v1210 = vpop.f32.mrf.mxu0
      %v1211 = vadd.f32 %v633, %v1210
      %v1212 = vpop.f32.mrf.mxu0
      %v1213 = vadd.f32 %v635, %v1212
      %1214 = vmatprep.mubr.bf16.mxu0 0
      %1215 = vmatmul.mubr.bf16.gmra.mxu0 %v959
      %v1216 = vpop.f32.mrf.mxu0
      %v1217 = vadd.f32 %v639, %v1216
      %v1218 = vpop.f32.mrf.mxu0
      %v1219 = vadd.f32 %v641, %v1218
      %v1220 = vpop.f32.mrf.mxu0
      %v1221 = vadd.f32 %v643, %v1220
      %v1222 = vpop.f32.mrf.mxu0
      %v1223 = vadd.f32 %v645, %v1222
      %1224 = vmatprep.mubr.bf16.mxu0 0
      %1225 = vmatmul.mubr.bf16.gmra.mxu0 %v960
      %v1226 = vpop.f32.mrf.mxu0
      %v1227 = vadd.f32 %v649, %v1226
      %v1228 = vpop.f32.mrf.mxu0
      %v1229 = vadd.f32 %v651, %v1228
      %v1230 = vpop.f32.mrf.mxu0
      %v1231 = vadd.f32 %v653, %v1230
      %v1232 = vpop.f32.mrf.mxu0
      %v1233 = vadd.f32 %v655, %v1232
      %1234 = vmatprep.mubr.bf16.mxu0 0
      %1235 = vmatmul.mubr.bf16.gmra.mxu0 %v961
      %v1236 = vpop.f32.mrf.mxu0
      %v1237 = vadd.f32 %v659, %v1236
      %v1238 = vpop.f32.mrf.mxu0
      %v1239 = vadd.f32 %v661, %v1238
      %v1240 = vpop.f32.mrf.mxu0
      %v1241 = vadd.f32 %v663, %v1240
      %v1242 = vpop.f32.mrf.mxu0
      %v1243 = vadd.f32 %v665, %v1242
      %1244 = vmatprep.mubr.bf16.mxu0 0
      %1245 = vmatmul.mubr.bf16.gmra.mxu0 %v962
      %v1246 = vpop.f32.mrf.mxu0
      %v1247 = vadd.f32 %v669, %v1246
      %v1248 = vpop.f32.mrf.mxu0
      %v1249 = vadd.f32 %v671, %v1248
      %v1250 = vpop.f32.mrf.mxu0
      %v1251 = vadd.f32 %v673, %v1250
      %v1252 = vpop.f32.mrf.mxu0
      %v1253 = vadd.f32 %v675, %v1252
      %1254 = vmatprep.mubr.bf16.mxu0 0
      %1255 = vmatmul.mubr.bf16.gmra.mxu0 %v963
      %v1256 = vpop.f32.mrf.mxu0
      %v1257 = vadd.f32 %v679, %v1256
      %v1258 = vpop.f32.mrf.mxu0
      %v1259 = vadd.f32 %v681, %v1258
      %v1260 = vpop.f32.mrf.mxu0
      %v1261 = vadd.f32 %v683, %v1260
      %v1262 = vpop.f32.mrf.mxu0
      %v1263 = vadd.f32 %v685, %v1262
      %1264 = vmatprep.mubr.bf16.mxu0 0
      %1265 = vmatmul.mubr.bf16.gmra.mxu0 %v964
      %v1266 = vpop.f32.mrf.mxu0
      %v1267 = vadd.f32 %v689, %v1266
      %v1268 = vpop.f32.mrf.mxu0
      %v1269 = vadd.f32 %v691, %v1268
      %v1270 = vpop.f32.mrf.mxu0
      %v1271 = vadd.f32 %v693, %v1270
      %v1272 = vpop.f32.mrf.mxu0
      %v1273 = vadd.f32 %v695, %v1272
      %1274 = vmatprep.mubr.bf16.mxu0 0
      %1275 = vmatmul.mubr.bf16.gmra.mxu0 %v965
      %v1276 = vpop.f32.mrf.mxu0
      %v1277 = vadd.f32 %v699, %v1276
      %v1278 = vpop.f32.mrf.mxu0
      %v1279 = vadd.f32 %v701, %v1278
      %v1280 = vpop.f32.mrf.mxu0
      %v1281 = vadd.f32 %v703, %v1280
      %v1282 = vpop.f32.mrf.mxu0
      %v1283 = vadd.f32 %v705, %v1282
      %1284 = vmatprep.mubr.bf16.mxu0 0
      %1285 = vmatmul.mubr.bf16.gmra.mxu0 %v966
      %v1286 = vpop.f32.mrf.mxu0
      %v1287 = vadd.f32 %v709, %v1286
      %v1288 = vpop.f32.mrf.mxu0
      %v1289 = vadd.f32 %v711, %v1288
      %v1290 = vpop.f32.mrf.mxu0
      %v1291 = vadd.f32 %v713, %v1290
      %v1292 = vpop.f32.mrf.mxu0
      %v1293 = vadd.f32 %v715, %v1292
      %1294 = vmatprep.mubr.bf16.mxu0 0
      %1295 = vmatmul.mubr.bf16.gmra.mxu0 %v967
      %v1296 = vpop.f32.mrf.mxu0
      %v1297 = vadd.f32 %v719, %v1296
      %v1298 = vpop.f32.mrf.mxu0
      %v1299 = vadd.f32 %v721, %v1298
      %v1300 = vpop.f32.mrf.mxu0
      %v1301 = vadd.f32 %v723, %v1300
      %v1302 = vpop.f32.mrf.mxu0
      %v1303 = vadd.f32 %v725, %v1302
      %1304 = vdwg.mxu0
      %1305 = vmatprep.subr.bf16.mxu0 0
      %1306 = vmatpush1.bf16.msra.mxu0 %v1087
      %1307 = vmatprep.subr.bf16.mxu0 0
      %1308 = vmatpush1.bf16.msra.mxu0 %v1084
      %1309 = vmatprep.subr.bf16.mxu0 0
      %1310 = vmatpush1.bf16.msra.mxu0 %v1081
      %1311 = vmatprep.subr.bf16.mxu0 0
      %1312 = vmatpush1.bf16.msra.mxu0 %v1078
      %1313 = vmatprep.subr.bf16.mxu0 0
      %1314 = vmatpush1.bf16.msra.mxu0 %v1075
      %1315 = vmatprep.subr.bf16.mxu0 0
      %1316 = vmatpush1.bf16.msra.mxu0 %v1072
      %1317 = vmatprep.subr.bf16.mxu0 0
      %1318 = vmatpush1.bf16.msra.mxu0 %v1069
      %1319 = vmatprep.subr.bf16.mxu0 0
      %1320 = vmatpush1.bf16.msra.mxu0 %v1066
      %1321 = vmatprep.subr.bf16.mxu0 0
      %1322 = vmatpush2.bf16.msra.mxu0 0
      %1323 = vmatprep.subr.bf16.mxu0 0
      %1324 = vmatpush2.bf16.msra.mxu0 0
      %1325 = vmatprep.subr.bf16.mxu0 0
      %1326 = vmatpush2.bf16.msra.mxu0 0
      %1327 = vmatprep.subr.bf16.mxu0 0
      %1328 = vmatpush2.bf16.msra.mxu0 0
      %1329 = vmatprep.subr.bf16.mxu0 0
      %1330 = vmatpush2.bf16.msra.mxu0 0
      %1331 = vmatprep.subr.bf16.mxu0 0
      %1332 = vmatpush2.bf16.msra.mxu0 0
      %1333 = vmatprep.subr.bf16.mxu0 0
      %1334 = vmatpush2.bf16.msra.mxu0 0
      %1335 = vmatprep.subr.bf16.mxu0 0
      %1336 = vmatpush2.bf16.msra.mxu0 0
      %1337 = vmatprep.mubr.bf16.mxu0 0
      %1338 = vmatmul.mubr.bf16.gmra.mxu0 %v952
      %v1339 = vpop.f32.mrf.mxu0
      %v1340 = vadd.f32 %v762, %v1339
      %v1341 = vpop.f32.mrf.mxu0
      %v1342 = vpop.f32.mrf.mxu0
      %v1343 = vadd.f32 %v765, %v1342
      %v1344 = vpop.f32.mrf.mxu0
      %1345 = vmatprep.mubr.bf16.mxu0 0
      %1346 = vmatmul.mubr.bf16.gmra.mxu0 %v953
      %v1347 = vpop.f32.mrf.mxu0
      %v1348 = vadd.f32 %v770, %v1347
      %v1349 = vpop.f32.mrf.mxu0
      %v1350 = vpop.f32.mrf.mxu0
      %v1351 = vadd.f32 %v773, %v1350
      %v1352 = vpop.f32.mrf.mxu0
      %1353 = vmatprep.mubr.bf16.mxu0 0
      %1354 = vmatmul.mubr.bf16.gmra.mxu0 %v954
      %v1355 = vpop.f32.mrf.mxu0
      %v1356 = vadd.f32 %v778, %v1355
      %v1357 = vpop.f32.mrf.mxu0
      %v1358 = vpop.f32.mrf.mxu0
      %v1359 = vadd.f32 %v781, %v1358
      %v1360 = vpop.f32.mrf.mxu0
      %1361 = vmatprep.mubr.bf16.mxu0 0
      %1362 = vmatmul.mubr.bf16.gmra.mxu0 %v955
      %v1363 = vpop.f32.mrf.mxu0
      %v1364 = vadd.f32 %v786, %v1363
      %v1365 = vpop.f32.mrf.mxu0
      %v1366 = vpop.f32.mrf.mxu0
      %v1367 = vadd.f32 %v789, %v1366
      %v1368 = vpop.f32.mrf.mxu0
      %1369 = vmatprep.mubr.bf16.mxu0 0
      %1370 = vmatmul.mubr.bf16.gmra.mxu0 %v956
      %v1371 = vpop.f32.mrf.mxu0
      %v1372 = vadd.f32 %v794, %v1371
      %v1373 = vpop.f32.mrf.mxu0
      %v1374 = vpop.f32.mrf.mxu0
      %v1375 = vadd.f32 %v797, %v1374
      %v1376 = vpop.f32.mrf.mxu0
      %1377 = vmatprep.mubr.bf16.mxu0 0
      %1378 = vmatmul.mubr.bf16.gmra.mxu0 %v957
      %v1379 = vpop.f32.mrf.mxu0
      %v1380 = vadd.f32 %v802, %v1379
      %v1381 = vpop.f32.mrf.mxu0
      %v1382 = vpop.f32.mrf.mxu0
      %v1383 = vadd.f32 %v805, %v1382
      %v1384 = vpop.f32.mrf.mxu0
      %1385 = vmatprep.mubr.bf16.mxu0 0
      %1386 = vmatmul.mubr.bf16.gmra.mxu0 %v958
      %v1387 = vpop.f32.mrf.mxu0
      %v1388 = vadd.f32 %v810, %v1387
      %v1389 = vpop.f32.mrf.mxu0
      %v1390 = vpop.f32.mrf.mxu0
      %v1391 = vadd.f32 %v813, %v1390
      %v1392 = vpop.f32.mrf.mxu0
      %1393 = vmatprep.mubr.bf16.mxu0 0
      %1394 = vmatmul.mubr.bf16.gmra.mxu0 %v959
      %v1395 = vpop.f32.mrf.mxu0
      %v1396 = vadd.f32 %v818, %v1395
      %v1397 = vpop.f32.mrf.mxu0
      %v1398 = vpop.f32.mrf.mxu0
      %v1399 = vadd.f32 %v821, %v1398
      %v1400 = vpop.f32.mrf.mxu0
      %1401 = vmatprep.mubr.bf16.mxu0 0
      %1402 = vmatmul.mubr.bf16.gmra.mxu0 %v960
      %v1403 = vpop.f32.mrf.mxu0
      %v1404 = vadd.f32 %v826, %v1403
      %v1405 = vpop.f32.mrf.mxu0
      %v1406 = vpop.f32.mrf.mxu0
      %v1407 = vadd.f32 %v829, %v1406
      %v1408 = vpop.f32.mrf.mxu0
      %1409 = vmatprep.mubr.bf16.mxu0 0
      %1410 = vmatmul.mubr.bf16.gmra.mxu0 %v961
      %v1411 = vpop.f32.mrf.mxu0
      %v1412 = vadd.f32 %v834, %v1411
      %v1413 = vpop.f32.mrf.mxu0
      %v1414 = vpop.f32.mrf.mxu0
      %v1415 = vadd.f32 %v837, %v1414
      %v1416 = vpop.f32.mrf.mxu0
      %1417 = vmatprep.mubr.bf16.mxu0 0
      %1418 = vmatmul.mubr.bf16.gmra.mxu0 %v962
      %v1419 = vpop.f32.mrf.mxu0
      %v1420 = vadd.f32 %v842, %v1419
      %v1421 = vpop.f32.mrf.mxu0
      %v1422 = vpop.f32.mrf.mxu0
      %v1423 = vadd.f32 %v845, %v1422
      %v1424 = vpop.f32.mrf.mxu0
      %1425 = vmatprep.mubr.bf16.mxu0 0
      %1426 = vmatmul.mubr.bf16.gmra.mxu0 %v963
      %v1427 = vpop.f32.mrf.mxu0
      %v1428 = vadd.f32 %v850, %v1427
      %v1429 = vpop.f32.mrf.mxu0
      %v1430 = vpop.f32.mrf.mxu0
      %v1431 = vadd.f32 %v853, %v1430
      %v1432 = vpop.f32.mrf.mxu0
      %1433 = vmatprep.mubr.bf16.mxu0 0
      %1434 = vmatmul.mubr.bf16.gmra.mxu0 %v964
      %v1435 = vpop.f32.mrf.mxu0
      %v1436 = vadd.f32 %v858, %v1435
      %v1437 = vpop.f32.mrf.mxu0
      %v1438 = vpop.f32.mrf.mxu0
      %v1439 = vadd.f32 %v861, %v1438
      %v1440 = vpop.f32.mrf.mxu0
      %1441 = vmatprep.mubr.bf16.mxu0 0
      %1442 = vmatmul.mubr.bf16.gmra.mxu0 %v965
      %v1443 = vpop.f32.mrf.mxu0
      %v1444 = vadd.f32 %v866, %v1443
      %v1445 = vpop.f32.mrf.mxu0
      %v1446 = vpop.f32.mrf.mxu0
      %v1447 = vadd.f32 %v869, %v1446
      %v1448 = vpop.f32.mrf.mxu0
      %1449 = vmatprep.mubr.bf16.mxu0 0
      %1450 = vmatmul.mubr.bf16.gmra.mxu0 %v966
      %v1451 = vpop.f32.mrf.mxu0
      %v1452 = vadd.f32 %v874, %v1451
      %v1453 = vpop.f32.mrf.mxu0
      %v1454 = vpop.f32.mrf.mxu0
      %v1455 = vadd.f32 %v877, %v1454
      %v1456 = vpop.f32.mrf.mxu0
      %1457 = vmatprep.mubr.bf16.mxu0 0
      %1458 = vmatmul.mubr.bf16.gmra.mxu0 %v967
      %v1459 = vpop.f32.mrf.mxu0
      %v1460 = vadd.f32 %v882, %v1459
      %v1461 = vpop.f32.mrf.mxu0
      %v1462 = vpop.f32.mrf.mxu0
      %v1463 = vadd.f32 %v885, %v1462
      %v1464 = vpop.f32.mrf.mxu0
      %1465 = vdwg.mxu0
      %v1466 = vld [vmem:[%s2] sm:$0x7]
      %v1468 = vlaneseq
      %v1469 = vshrl.u32 %v1468, 7
      %v1470 = vsub.s32 0, %v1469
      %v1471 = vrot.slane %v1466, %v1470
      %v1472 = vlaneseq
      %v1473 = vshrl.u32 %v1472, 7
      %v1474 = vsub.s32 1, %v1473
      %v1475 = vrot.slane %v1466, %v1474
      %v1476 = vlaneseq
      %v1477 = vshrl.u32 %v1476, 7
      %v1478 = vsub.s32 2, %v1477
      %v1479 = vrot.slane %v1466, %v1478
      %v1483 = vadd.f32 %v1147, %v1471
      %v1484 = vadd.f32 %v1149, %v1475
      %v1485 = vadd.f32 %v1340, %v1479
      %v1486 = vadd.f32 %v1151, %v1471
      %v1487 = vadd.f32 %v1153, %v1475
      %v1488 = vadd.f32 %v1343, %v1479
      %v1489 = vadd.f32 %v1157, %v1471
      %v1490 = vadd.f32 %v1159, %v1475
      %v1491 = vadd.f32 %v1348, %v1479
      %v1492 = vadd.f32 %v1161, %v1471
      %v1493 = vadd.f32 %v1163, %v1475
      %v1494 = vadd.f32 %v1351, %v1479
      %v1495 = vadd.f32 %v1167, %v1471
      %v1496 = vadd.f32 %v1169, %v1475
      %v1497 = vadd.f32 %v1356, %v1479
      %v1498 = vadd.f32 %v1171, %v1471
      %v1499 = vadd.f32 %v1173, %v1475
      %v1500 = vadd.f32 %v1359, %v1479
      %v1501 = vadd.f32 %v1177, %v1471
      %v1502 = vadd.f32 %v1179, %v1475
      %v1503 = vadd.f32 %v1364, %v1479
      %v1504 = vadd.f32 %v1181, %v1471
      %v1505 = vadd.f32 %v1183, %v1475
      %v1506 = vadd.f32 %v1367, %v1479
      %v1507 = vadd.f32 %v1187, %v1471
      %v1508 = vadd.f32 %v1189, %v1475
      %v1509 = vadd.f32 %v1372, %v1479
      %v1510 = vadd.f32 %v1191, %v1471
      %v1511 = vadd.f32 %v1193, %v1475
      %v1512 = vadd.f32 %v1375, %v1479
      %v1513 = vadd.f32 %v1197, %v1471
      %v1514 = vadd.f32 %v1199, %v1475
      %v1515 = vadd.f32 %v1380, %v1479
      %v1516 = vadd.f32 %v1201, %v1471
      %v1517 = vadd.f32 %v1203, %v1475
      %v1518 = vadd.f32 %v1383, %v1479
      %v1519 = vadd.f32 %v1207, %v1471
      %v1520 = vadd.f32 %v1209, %v1475
      %v1521 = vadd.f32 %v1388, %v1479
      %v1522 = vadd.f32 %v1211, %v1471
      %v1523 = vadd.f32 %v1213, %v1475
      %v1524 = vadd.f32 %v1391, %v1479
      %v1525 = vadd.f32 %v1217, %v1471
      %v1526 = vadd.f32 %v1219, %v1475
      %v1527 = vadd.f32 %v1396, %v1479
      %v1528 = vadd.f32 %v1221, %v1471
      %v1529 = vadd.f32 %v1223, %v1475
      %v1530 = vadd.f32 %v1399, %v1479
      %v1531 = vadd.f32 %v1227, %v1471
      %v1532 = vadd.f32 %v1229, %v1475
      %v1533 = vadd.f32 %v1404, %v1479
      %v1534 = vadd.f32 %v1231, %v1471
      %v1535 = vadd.f32 %v1233, %v1475
      %v1536 = vadd.f32 %v1407, %v1479
      %v1537 = vadd.f32 %v1237, %v1471
      %v1538 = vadd.f32 %v1239, %v1475
      %v1539 = vadd.f32 %v1412, %v1479
      %v1540 = vadd.f32 %v1241, %v1471
      %v1541 = vadd.f32 %v1243, %v1475
      %v1542 = vadd.f32 %v1415, %v1479
      %v1543 = vadd.f32 %v1247, %v1471
      %v1544 = vadd.f32 %v1249, %v1475
      %v1545 = vadd.f32 %v1420, %v1479
      %v1546 = vadd.f32 %v1251, %v1471
      %v1547 = vadd.f32 %v1253, %v1475
      %v1548 = vadd.f32 %v1423, %v1479
      %v1549 = vadd.f32 %v1257, %v1471
      %v1550 = vadd.f32 %v1259, %v1475
      %v1551 = vadd.f32 %v1428, %v1479
      %v1552 = vadd.f32 %v1261, %v1471
      %v1553 = vadd.f32 %v1263, %v1475
      %v1554 = vadd.f32 %v1431, %v1479
      %v1555 = vadd.f32 %v1267, %v1471
      %v1556 = vadd.f32 %v1269, %v1475
      %v1557 = vadd.f32 %v1436, %v1479
      %v1558 = vadd.f32 %v1271, %v1471
      %v1559 = vadd.f32 %v1273, %v1475
      %v1560 = vadd.f32 %v1439, %v1479
      %v1561 = vadd.f32 %v1277, %v1471
      %v1562 = vadd.f32 %v1279, %v1475
      %v1563 = vadd.f32 %v1444, %v1479
      %v1564 = vadd.f32 %v1281, %v1471
      %v1565 = vadd.f32 %v1283, %v1475
      %v1566 = vadd.f32 %v1447, %v1479
      %v1567 = vadd.f32 %v1287, %v1471
      %v1568 = vadd.f32 %v1289, %v1475
      %v1569 = vadd.f32 %v1452, %v1479
      %v1570 = vadd.f32 %v1291, %v1471
      %v1571 = vadd.f32 %v1293, %v1475
      %v1572 = vadd.f32 %v1455, %v1479
      %v1573 = vadd.f32 %v1297, %v1471
      %v1574 = vadd.f32 %v1299, %v1475
      %v1575 = vadd.f32 %v1460, %v1479
      %v1576 = vadd.f32 %v1301, %v1471
      %v1577 = vadd.f32 %v1303, %v1475
      %v1578 = vadd.f32 %v1463, %v1479
      %v1579 = vmax.f32 %v1483, 0.0
      %v1580 = vmax.f32 %v1484, 0.0
      %v1581 = vmax.f32 %v1485, 0.0
      %v1582 = vmax.f32 %v1486, 0.0
      %v1583 = vmax.f32 %v1487, 0.0
      %v1584 = vmax.f32 %v1488, 0.0
      %v1585 = vmax.f32 %v1489, 0.0
      %v1586 = vmax.f32 %v1490, 0.0
      %v1587 = vmax.f32 %v1491, 0.0
      %v1588 = vmax.f32 %v1492, 0.0
      %v1589 = vmax.f32 %v1493, 0.0
      %v1590 = vmax.f32 %v1494, 0.0
      %v1591 = vmax.f32 %v1495, 0.0
      %v1592 = vmax.f32 %v1496, 0.0
      %v1593 = vmax.f32 %v1497, 0.0
      %v1594 = vmax.f32 %v1498, 0.0
      %v1595 = vmax.f32 %v1499, 0.0
      %v1596 = vmax.f32 %v1500, 0.0
      %v1597 = vmax.f32 %v1501, 0.0
      %v1598 = vmax.f32 %v1502, 0.0
      %v1599 = vmax.f32 %v1503, 0.0
      %v1600 = vmax.f32 %v1504, 0.0
      %v1601 = vmax.f32 %v1505, 0.0
      %v1602 = vmax.f32 %v1506, 0.0
      %v1603 = vmax.f32 %v1507, 0.0
      %v1604 = vmax.f32 %v1508, 0.0
      %v1605 = vmax.f32 %v1509, 0.0
      %v1606 = vmax.f32 %v1510, 0.0
      %v1607 = vmax.f32 %v1511, 0.0
      %v1608 = vmax.f32 %v1512, 0.0
      %v1609 = vmax.f32 %v1513, 0.0
      %v1610 = vmax.f32 %v1514, 0.0
      %v1611 = vmax.f32 %v1515, 0.0
      %v1612 = vmax.f32 %v1516, 0.0
      %v1613 = vmax.f32 %v1517, 0.0
      %v1614 = vmax.f32 %v1518, 0.0
      %v1615 = vmax.f32 %v1519, 0.0
      %v1616 = vmax.f32 %v1520, 0.0
      %v1617 = vmax.f32 %v1521, 0.0
      %v1618 = vmax.f32 %v1522, 0.0
      %v1619 = vmax.f32 %v1523, 0.0
      %v1620 = vmax.f32 %v1524, 0.0
      %v1621 = vmax.f32 %v1525, 0.0
      %v1622 = vmax.f32 %v1526, 0.0
      %v1623 = vmax.f32 %v1527, 0.0
      %v1624 = vmax.f32 %v1528, 0.0
      %v1625 = vmax.f32 %v1529, 0.0
      %v1626 = vmax.f32 %v1530, 0.0
      %v1627 = vmax.f32 %v1531, 0.0
      %v1628 = vmax.f32 %v1532, 0.0
      %v1629 = vmax.f32 %v1533, 0.0
      %v1630 = vmax.f32 %v1534, 0.0
      %v1631 = vmax.f32 %v1535, 0.0
      %v1632 = vmax.f32 %v1536, 0.0
      %v1633 = vmax.f32 %v1537, 0.0
      %v1634 = vmax.f32 %v1538, 0.0
      %v1635 = vmax.f32 %v1539, 0.0
      %v1636 = vmax.f32 %v1540, 0.0
      %v1637 = vmax.f32 %v1541, 0.0
      %v1638 = vmax.f32 %v1542, 0.0
      %v1639 = vmax.f32 %v1543, 0.0
      %v1640 = vmax.f32 %v1544, 0.0
      %v1641 = vmax.f32 %v1545, 0.0
      %v1642 = vmax.f32 %v1546, 0.0
      %v1643 = vmax.f32 %v1547, 0.0
      %v1644 = vmax.f32 %v1548, 0.0
      %v1645 = vmax.f32 %v1549, 0.0
      %v1646 = vmax.f32 %v1550, 0.0
      %v1647 = vmax.f32 %v1551, 0.0
      %v1648 = vmax.f32 %v1552, 0.0
      %v1649 = vmax.f32 %v1553, 0.0
      %v1650 = vmax.f32 %v1554, 0.0
      %v1651 = vmax.f32 %v1555, 0.0
      %v1652 = vmax.f32 %v1556, 0.0
      %v1653 = vmax.f32 %v1557, 0.0
      %v1654 = vmax.f32 %v1558, 0.0
      %v1655 = vmax.f32 %v1559, 0.0
      %v1656 = vmax.f32 %v1560, 0.0
      %v1657 = vmax.f32 %v1561, 0.0
      %v1658 = vmax.f32 %v1562, 0.0
      %v1659 = vmax.f32 %v1563, 0.0
      %v1660 = vmax.f32 %v1564, 0.0
      %v1661 = vmax.f32 %v1565, 0.0
      %v1662 = vmax.f32 %v1566, 0.0
      %v1663 = vmax.f32 %v1567, 0.0
      %v1664 = vmax.f32 %v1568, 0.0
      %v1665 = vmax.f32 %v1569, 0.0
      %v1666 = vmax.f32 %v1570, 0.0
      %v1667 = vmax.f32 %v1571, 0.0
      %v1668 = vmax.f32 %v1572, 0.0
      %v1669 = vmax.f32 %v1573, 0.0
      %v1670 = vmax.f32 %v1574, 0.0
      %v1671 = vmax.f32 %v1575, 0.0
      %v1672 = vmax.f32 %v1576, 0.0
      %v1673 = vmax.f32 %v1577, 0.0
      %v1674 = vmax.f32 %v1578, 0.0
      %v1675 = vmin.f32 %v1579, 6.0
      %v1676 = vmin.f32 %v1580, 6.0
      %v1677 = vmin.f32 %v1581, 6.0
      %v1678 = vmin.f32 %v1582, 6.0
      %v1679 = vmin.f32 %v1583, 6.0
      %v1680 = vmin.f32 %v1584, 6.0
      %v1681 = vmin.f32 %v1585, 6.0
      %v1682 = vmin.f32 %v1586, 6.0
      %v1683 = vmin.f32 %v1587, 6.0
      %v1684 = vmin.f32 %v1588, 6.0
      %v1685 = vmin.f32 %v1589, 6.0
      %v1686 = vmin.f32 %v1590, 6.0
      %v1687 = vmin.f32 %v1591, 6.0
      %v1688 = vmin.f32 %v1592, 6.0
      %v1689 = vmin.f32 %v1593, 6.0
      %v1690 = vmin.f32 %v1594, 6.0
      %v1691 = vmin.f32 %v1595, 6.0
      %v1692 = vmin.f32 %v1596, 6.0
      %v1693 = vmin.f32 %v1597, 6.0
      %v1694 = vmin.f32 %v1598, 6.0
      %v1695 = vmin.f32 %v1599, 6.0
      %v1696 = vmin.f32 %v1600, 6.0
      %v1697 = vmin.f32 %v1601, 6.0
      %v1698 = vmin.f32 %v1602, 6.0
      %v1699 = vmin.f32 %v1603, 6.0
      %v1700 = vmin.f32 %v1604, 6.0
      %v1701 = vmin.f32 %v1605, 6.0
      %v1702 = vmin.f32 %v1606, 6.0
      %v1703 = vmin.f32 %v1607, 6.0
      %v1704 = vmin.f32 %v1608, 6.0
      %v1705 = vmin.f32 %v1609, 6.0
      %v1706 = vmin.f32 %v1610, 6.0
      %v1707 = vmin.f32 %v1611, 6.0
      %v1708 = vmin.f32 %v1612, 6.0
      %v1709 = vmin.f32 %v1613, 6.0
      %v1710 = vmin.f32 %v1614, 6.0
      %v1711 = vmin.f32 %v1615, 6.0
      %v1712 = vmin.f32 %v1616, 6.0
      %v1713 = vmin.f32 %v1617, 6.0
      %v1714 = vmin.f32 %v1618, 6.0
      %v1715 = vmin.f32 %v1619, 6.0
      %v1716 = vmin.f32 %v1620, 6.0
      %v1717 = vmin.f32 %v1621, 6.0
      %v1718 = vmin.f32 %v1622, 6.0
      %v1719 = vmin.f32 %v1623, 6.0
      %v1720 = vmin.f32 %v1624, 6.0
      %v1721 = vmin.f32 %v1625, 6.0
      %v1722 = vmin.f32 %v1626, 6.0
      %v1723 = vmin.f32 %v1627, 6.0
      %v1724 = vmin.f32 %v1628, 6.0
      %v1725 = vmin.f32 %v1629, 6.0
      %v1726 = vmin.f32 %v1630, 6.0
      %v1727 = vmin.f32 %v1631, 6.0
      %v1728 = vmin.f32 %v1632, 6.0
      %v1729 = vmin.f32 %v1633, 6.0
      %v1730 = vmin.f32 %v1634, 6.0
      %v1731 = vmin.f32 %v1635, 6.0
      %v1732 = vmin.f32 %v1636, 6.0
      %v1733 = vmin.f32 %v1637, 6.0
      %v1734 = vmin.f32 %v1638, 6.0
      %v1735 = vmin.f32 %v1639, 6.0
      %v1736 = vmin.f32 %v1640, 6.0
      %v1737 = vmin.f32 %v1641, 6.0
      %v1738 = vmin.f32 %v1642, 6.0
      %v1739 = vmin.f32 %v1643, 6.0
      %v1740 = vmin.f32 %v1644, 6.0
      %v1741 = vmin.f32 %v1645, 6.0
      %v1742 = vmin.f32 %v1646, 6.0
      %v1743 = vmin.f32 %v1647, 6.0
      %v1744 = vmin.f32 %v1648, 6.0
      %v1745 = vmin.f32 %v1649, 6.0
      %v1746 = vmin.f32 %v1650, 6.0
      %v1747 = vmin.f32 %v1651, 6.0
      %v1748 = vmin.f32 %v1652, 6.0
      %v1749 = vmin.f32 %v1653, 6.0
      %v1750 = vmin.f32 %v1654, 6.0
      %v1751 = vmin.f32 %v1655, 6.0
      %v1752 = vmin.f32 %v1656, 6.0
      %v1753 = vmin.f32 %v1657, 6.0
      %v1754 = vmin.f32 %v1658, 6.0
      %v1755 = vmin.f32 %v1659, 6.0
      %v1756 = vmin.f32 %v1660, 6.0
      %v1757 = vmin.f32 %v1661, 6.0
      %v1758 = vmin.f32 %v1662, 6.0
      %v1759 = vmin.f32 %v1663, 6.0
      %v1760 = vmin.f32 %v1664, 6.0
      %v1761 = vmin.f32 %v1665, 6.0
      %v1762 = vmin.f32 %v1666, 6.0
      %v1763 = vmin.f32 %v1667, 6.0
      %v1764 = vmin.f32 %v1668, 6.0
      %v1765 = vmin.f32 %v1669, 6.0
      %v1766 = vmin.f32 %v1670, 6.0
      %v1767 = vmin.f32 %v1671, 6.0
      %v1768 = vmin.f32 %v1672, 6.0
      %v1769 = vmin.f32 %v1673, 6.0
      %v1770 = vmin.f32 %v1674, 6.0
      %v1771 = vmul.f32 %v1675, 0.16666667
      %v1772 = vmul.f32 %v1676, 0.16666667
      %v1773 = vmul.f32 %v1677, 0.16666667
      %v1774 = vmul.f32 %v1678, 0.16666667
      %v1775 = vmul.f32 %v1679, 0.16666667
      %v1776 = vmul.f32 %v1680, 0.16666667
      %v1777 = vmul.f32 %v1681, 0.16666667
      %v1778 = vmul.f32 %v1682, 0.16666667
      %v1779 = vmul.f32 %v1683, 0.16666667
      %v1780 = vmul.f32 %v1684, 0.16666667
      %v1781 = vmul.f32 %v1685, 0.16666667
      %v1782 = vmul.f32 %v1686, 0.16666667
      %v1783 = vmul.f32 %v1687, 0.16666667
      %v1784 = vmul.f32 %v1688, 0.16666667
      %v1785 = vmul.f32 %v1689, 0.16666667
      %v1786 = vmul.f32 %v1690, 0.16666667
      %v1787 = vmul.f32 %v1691, 0.16666667
      %v1788 = vmul.f32 %v1692, 0.16666667
      %v1789 = vmul.f32 %v1693, 0.16666667
      %v1790 = vmul.f32 %v1694, 0.16666667
      %v1791 = vmul.f32 %v1695, 0.16666667
      %v1792 = vmul.f32 %v1696, 0.16666667
      %v1793 = vmul.f32 %v1697, 0.16666667
      %v1794 = vmul.f32 %v1698, 0.16666667
      %v1795 = vmul.f32 %v1699, 0.16666667
      %v1796 = vmul.f32 %v1700, 0.16666667
      %v1797 = vmul.f32 %v1701, 0.16666667
      %v1798 = vmul.f32 %v1702, 0.16666667
      %v1799 = vmul.f32 %v1703, 0.16666667
      %v1800 = vmul.f32 %v1704, 0.16666667
      %v1801 = vmul.f32 %v1705, 0.16666667
      %v1802 = vmul.f32 %v1706, 0.16666667
      %v1803 = vmul.f32 %v1707, 0.16666667
      %v1804 = vmul.f32 %v1708, 0.16666667
      %v1805 = vmul.f32 %v1709, 0.16666667
      %v1806 = vmul.f32 %v1710, 0.16666667
      %v1807 = vmul.f32 %v1711, 0.16666667
      %v1808 = vmul.f32 %v1712, 0.16666667
      %v1809 = vmul.f32 %v1713, 0.16666667
      %v1810 = vmul.f32 %v1714, 0.16666667
      %v1811 = vmul.f32 %v1715, 0.16666667
      %v1812 = vmul.f32 %v1716, 0.16666667
      %v1813 = vmul.f32 %v1717, 0.16666667
      %v1814 = vmul.f32 %v1718, 0.16666667
      %v1815 = vmul.f32 %v1719, 0.16666667
      %v1816 = vmul.f32 %v1720, 0.16666667
      %v1817 = vmul.f32 %v1721, 0.16666667
      %v1818 = vmul.f32 %v1722, 0.16666667
      %v1819 = vmul.f32 %v1723, 0.16666667
      %v1820 = vmul.f32 %v1724, 0.16666667
      %v1821 = vmul.f32 %v1725, 0.16666667
      %v1822 = vmul.f32 %v1726, 0.16666667
      %v1823 = vmul.f32 %v1727, 0.16666667
      %v1824 = vmul.f32 %v1728, 0.16666667
      %v1825 = vmul.f32 %v1729, 0.16666667
      %v1826 = vmul.f32 %v1730, 0.16666667
      %v1827 = vmul.f32 %v1731, 0.16666667
      %v1828 = vmul.f32 %v1732, 0.16666667
      %v1829 = vmul.f32 %v1733, 0.16666667
      %v1830 = vmul.f32 %v1734, 0.16666667
      %v1831 = vmul.f32 %v1735, 0.16666667
      %v1832 = vmul.f32 %v1736, 0.16666667
      %v1833 = vmul.f32 %v1737, 0.16666667
      %v1834 = vmul.f32 %v1738, 0.16666667
      %v1835 = vmul.f32 %v1739, 0.16666667
      %v1836 = vmul.f32 %v1740, 0.16666667
      %v1837 = vmul.f32 %v1741, 0.16666667
      %v1838 = vmul.f32 %v1742, 0.16666667
      %v1839 = vmul.f32 %v1743, 0.16666667
      %v1840 = vmul.f32 %v1744, 0.16666667
      %v1841 = vmul.f32 %v1745, 0.16666667
      %v1842 = vmul.f32 %v1746, 0.16666667
      %v1843 = vmul.f32 %v1747, 0.16666667
      %v1844 = vmul.f32 %v1748, 0.16666667
      %v1845 = vmul.f32 %v1749, 0.16666667
      %v1846 = vmul.f32 %v1750, 0.16666667
      %v1847 = vmul.f32 %v1751, 0.16666667
      %v1848 = vmul.f32 %v1752, 0.16666667
      %v1849 = vmul.f32 %v1753, 0.16666667
      %v1850 = vmul.f32 %v1754, 0.16666667
      %v1851 = vmul.f32 %v1755, 0.16666667
      %v1852 = vmul.f32 %v1756, 0.16666667
      %v1853 = vmul.f32 %v1757, 0.16666667
      %v1854 = vmul.f32 %v1758, 0.16666667
      %v1855 = vmul.f32 %v1759, 0.16666667
      %v1856 = vmul.f32 %v1760, 0.16666667
      %v1857 = vmul.f32 %v1761, 0.16666667
      %v1858 = vmul.f32 %v1762, 0.16666667
      %v1859 = vmul.f32 %v1763, 0.16666667
      %v1860 = vmul.f32 %v1764, 0.16666667
      %v1861 = vmul.f32 %v1765, 0.16666667
      %v1862 = vmul.f32 %v1766, 0.16666667
      %v1863 = vmul.f32 %v1767, 0.16666667
      %v1864 = vmul.f32 %v1768, 0.16666667
      %v1865 = vmul.f32 %v1769, 0.16666667
      %v1866 = vmul.f32 %v1770, 0.16666667
      %1867 = vst [vmem:[%s177] sm:$0xff] %v1771
      %1868 = vst [vmem:[%s177 + $0x8] sm:$0xff] %v1772
      %1869 = vst [vmem:[%s177 + $0x10] sm:$0xff] %v1773
      %1870 = vst [vmem:[%s177 + $0x18] sm:$0xff] %v1774
      %1871 = vst [vmem:[%s177 + $0x20] sm:$0xff] %v1775
      %1872 = vst [vmem:[%s177 + $0x28] sm:$0xff] %v1776
      %1873 = vst [vmem:[%s177 + $0x30] sm:$0xff] %v1777
      %1874 = vst [vmem:[%s177 + $0x38] sm:$0xff] %v1778
      %1875 = vst [vmem:[%s177 + $0x40] sm:$0xff] %v1779
      %1876 = vst [vmem:[%s177 + $0x48] sm:$0xff] %v1780
      %1877 = vst [vmem:[%s177 + $0x50] sm:$0xff] %v1781
      %1878 = vst [vmem:[%s177 + $0x58] sm:$0xff] %v1782
      %1879 = vst [vmem:[%s177 + $0x60] sm:$0xff] %v1783
      %1880 = vst [vmem:[%s177 + $0x68] sm:$0xff] %v1784
      %1881 = vst [vmem:[%s177 + $0x70] sm:$0xff] %v1785
      %1882 = vst [vmem:[%s177 + $0x78] sm:$0xff] %v1786
      %1883 = vst [vmem:[%s177 + $0x80] sm:$0xff] %v1787
      %1884 = vst [vmem:[%s177 + $0x88] sm:$0xff] %v1788
      %1885 = vst [vmem:[%s177 + $0x90] sm:$0xff] %v1789
      %1886 = vst [vmem:[%s177 + $0x98] sm:$0xff] %v1790
      %1887 = vst [vmem:[%s177 + $0xa0] sm:$0xff] %v1791
      %1888 = vst [vmem:[%s177 + $0xa8] sm:$0xff] %v1792
      %1889 = vst [vmem:[%s177 + $0xb0] sm:$0xff] %v1793
      %1890 = vst [vmem:[%s177 + $0xb8] sm:$0xff] %v1794
      %1891 = vst [vmem:[%s177 + $0xc0] sm:$0xff] %v1795
      %1892 = vst [vmem:[%s177 + $0xc8] sm:$0xff] %v1796
      %1893 = vst [vmem:[%s177 + $0xd0] sm:$0xff] %v1797
      %1894 = vst [vmem:[%s177 + $0xd8] sm:$0xff] %v1798
      %1895 = vst [vmem:[%s177 + $0xe0] sm:$0xff] %v1799
      %1896 = vst [vmem:[%s177 + $0xe8] sm:$0xff] %v1800
      %1897 = vst [vmem:[%s177 + $0xf0] sm:$0xff] %v1801
      %1898 = vst [vmem:[%s177 + $0xf8] sm:$0xff] %v1802
      %1899 = vst [vmem:[%s177 + $0x100] sm:$0xff] %v1803
      %1900 = vst [vmem:[%s177 + $0x108] sm:$0xff] %v1804
      %1901 = vst [vmem:[%s177 + $0x110] sm:$0xff] %v1805
      %1902 = vst [vmem:[%s177 + $0x118] sm:$0xff] %v1806
      %1903 = vst [vmem:[%s177 + $0x120] sm:$0xff] %v1807
      %1904 = vst [vmem:[%s177 + $0x128] sm:$0xff] %v1808
      %1905 = vst [vmem:[%s177 + $0x130] sm:$0xff] %v1809
      %1906 = vst [vmem:[%s177 + $0x138] sm:$0xff] %v1810
      %1907 = vst [vmem:[%s177 + $0x140] sm:$0xff] %v1811
      %1908 = vst [vmem:[%s177 + $0x148] sm:$0xff] %v1812
      %1909 = vst [vmem:[%s177 + $0x150] sm:$0xff] %v1813
      %1910 = vst [vmem:[%s177 + $0x158] sm:$0xff] %v1814
      %1911 = vst [vmem:[%s177 + $0x160] sm:$0xff] %v1815
      %1912 = vst [vmem:[%s177 + $0x168] sm:$0xff] %v1816
      %1913 = vst [vmem:[%s177 + $0x170] sm:$0xff] %v1817
      %1914 = vst [vmem:[%s177 + $0x178] sm:$0xff] %v1818
      %1915 = vst [vmem:[%s177 + $0x180] sm:$0xff] %v1819
      %1916 = vst [vmem:[%s177 + $0x188] sm:$0xff] %v1820
      %1917 = vst [vmem:[%s177 + $0x190] sm:$0xff] %v1821
      %1918 = vst [vmem:[%s177 + $0x198] sm:$0xff] %v1822
      %1919 = vst [vmem:[%s177 + $0x1a0] sm:$0xff] %v1823
      %1920 = vst [vmem:[%s177 + $0x1a8] sm:$0xff] %v1824
      %1921 = vst [vmem:[%s177 + $0x1b0] sm:$0xff] %v1825
      %1922 = vst [vmem:[%s177 + $0x1b8] sm:$0xff] %v1826
      %1923 = vst [vmem:[%s177 + $0x1c0] sm:$0xff] %v1827
      %1924 = vst [vmem:[%s177 + $0x1c8] sm:$0xff] %v1828
      %1925 = vst [vmem:[%s177 + $0x1d0] sm:$0xff] %v1829
      %1926 = vst [vmem:[%s177 + $0x1d8] sm:$0xff] %v1830
      %1927 = vst [vmem:[%s177 + $0x1e0] sm:$0xff] %v1831
      %1928 = vst [vmem:[%s177 + $0x1e8] sm:$0xff] %v1832
      %1929 = vst [vmem:[%s177 + $0x1f0] sm:$0xff] %v1833
      %1930 = vst [vmem:[%s177 + $0x1f8] sm:$0xff] %v1834
      %1931 = vst [vmem:[%s177 + $0x200] sm:$0xff] %v1835
      %1932 = vst [vmem:[%s177 + $0x208] sm:$0xff] %v1836
      %1933 = vst [vmem:[%s177 + $0x210] sm:$0xff] %v1837
      %1934 = vst [vmem:[%s177 + $0x218] sm:$0xff] %v1838
      %1935 = vst [vmem:[%s177 + $0x220] sm:$0xff] %v1839
      %1936 = vst [vmem:[%s177 + $0x228] sm:$0xff] %v1840
      %1937 = vst [vmem:[%s177 + $0x230] sm:$0xff] %v1841
      %1938 = vst [vmem:[%s177 + $0x238] sm:$0xff] %v1842
      %1939 = vst [vmem:[%s177 + $0x240] sm:$0xff] %v1843
      %1940 = vst [vmem:[%s177 + $0x248] sm:$0xff] %v1844
      %1941 = vst [vmem:[%s177 + $0x250] sm:$0xff] %v1845
      %1942 = vst [vmem:[%s177 + $0x258] sm:$0xff] %v1846
      %1943 = vst [vmem:[%s177 + $0x260] sm:$0xff] %v1847
      %1944 = vst [vmem:[%s177 + $0x268] sm:$0xff] %v1848
      %1945 = vst [vmem:[%s177 + $0x270] sm:$0xff] %v1849
      %1946 = vst [vmem:[%s177 + $0x278] sm:$0xff] %v1850
      %1947 = vst [vmem:[%s177 + $0x280] sm:$0xff] %v1851
      %1948 = vst [vmem:[%s177 + $0x288] sm:$0xff] %v1852
      %1949 = vst [vmem:[%s177 + $0x290] sm:$0xff] %v1853
      %1950 = vst [vmem:[%s177 + $0x298] sm:$0xff] %v1854
      %1951 = vst [vmem:[%s177 + $0x2a0] sm:$0xff] %v1855
      %1952 = vst [vmem:[%s177 + $0x2a8] sm:$0xff] %v1856
      %1953 = vst [vmem:[%s177 + $0x2b0] sm:$0xff] %v1857
      %1954 = vst [vmem:[%s177 + $0x2b8] sm:$0xff] %v1858
      %1955 = vst [vmem:[%s177 + $0x2c0] sm:$0xff] %v1859
      %1956 = vst [vmem:[%s177 + $0x2c8] sm:$0xff] %v1860
      %1957 = vst [vmem:[%s177 + $0x2d0] sm:$0xff] %v1861
      %1958 = vst [vmem:[%s177 + $0x2d8] sm:$0xff] %v1862
      %1959 = vst [vmem:[%s177 + $0x2e0] sm:$0xff] %v1863
      %1960 = vst [vmem:[%s177 + $0x2e8] sm:$0xff] %v1864
      %1961 = vst [vmem:[%s177 + $0x2f0] sm:$0xff] %v1865
      %1962 = vst [vmem:[%s177 + $0x2f8] sm:$0xff] %v1866
      %s1963 = smul.u32 32, %s14
      %p1964 = scmp.lt.s32.totalorder %s1963, 63
      %s1965 = scalar_select %p1964, %s1963, 63
      %s1966 = smul.addr %s1965, 3
      %s1967 = smul.addr %s1966, 8
      %s1968 = scalar_lea.vmem %s3, %s1967
      // Predicated region
      $region33: #{model_forward.1} parent=31 // pred_check
        %p1969 = pneg %p100
      $region34: #{model_forward.1} parent=31 // pred_check_branch
        %1971 = sbr.rel (%p1969) target = $region36
      $region35: #{model_forward.1} parent=31 // pred_region
        %s1972 = smul.u32 32, %s14
      $region36: #{model_forward.1} parent=31 // pred_fallthru
        _
    $region32: #{model_forward.1} parent=5 // pred_fallthru
      _
    %p1973 = scmp.le.s32.totalorder 2, %s9
    // Predicated region
    $region37: #{model_forward.1} parent=5 // pred_check
      %p1974 = pneg %p1973
    $region38: #{model_forward.1} parent=5 // pred_check_branch
      %1976 = sbr.rel (%p1974) target = $region40
    $region39: #{model_forward.1} parent=5 // pred_region
      %s1977 = ssub.s32 %s9, 2
      // Predicated region
      $region41: #{model_forward.1} parent=39 // pred_check
        %p1978 = pneg %p106
      $region42: #{model_forward.1} parent=39 // pred_check_branch
        %1980 = sbr.rel (%p1978) target = $region44
      $region43: #{model_forward.1} parent=39 // pred_region
        %s1981 = smul.u32 32, %s15
        %p1982 = scmp.lt.s32.totalorder %s1981, 63
        %s1983 = scalar_select %p1982, %s1981, 63
        %s1984 = smul.addr %s1983, 3
        %s1985 = smul.addr %s1984, 8
        %s1986 = scalar_lea.vmem %s3, %s1985
      $region44: #{model_forward.1} parent=39 // pred_fallthru
        _
    $region40: #{model_forward.1} parent=5 // pred_fallthru
      _
  $region6: #{model_forward.1} parent=0 // loop_footer
    %s13 = sadd.s32 1, %s9
  $region7: #{model_forward.1} parent=0 // loop_footer_branch
    %8 = sbr.rel target = $region3
  $region8: #{model_forward.1} parent=0 // loop_exit
    _

</llo_original>
